<compile_context>
chip_gen: v5e
topology: v5e:2x2
jax: 0.10.0
libtpu: 0.0.40
codegen_flags: <defaults>
</compile_context>

<pallas_src>
import functools

import numpy as np
import jax
import jax.numpy as jnp
from jax import lax
from jax.experimental import pallas as pl
from jax.experimental.pallas import tpu as pltpu


def _round_up(x, m):
    return (x + m - 1) // m * m


def _pad_dim(d):
    """Smallest power-of-two divisor of 128 that is >= d (or multiple of 128)."""
    if d > 128:
        return _round_up(d, 128)
    p = 1
    while p < d:
        p *= 2
    return p


def _device_supports_bf16_vpu():
    try:
        kind = jax.devices()[0].device_kind.lower()
    except Exception:  # pragma: no cover - detection failure falls back to f32
        return False
    # v6e / v7x have native bf16 VPU; v5e and older would emulate it.
    return any(t in kind for t in ("v6", "v7", "tpu7"))


def _codebook_kernel(z_ref, es_ref, eg_ref, esq_ref, zq_ref, idx_ref, loss_ref,
                     *, slots, n_valid, need_mask, scores_dtype):
    """One packed row-tile of the flattened latents.

    z_ref:    (tm_p, W)      f32  packed tile: packed row r holds logical rows
                                  r*slots .. r*slots+slots-1, each D_pad wide.
    es_ref:   (W, S*K)       sdt  E_score  = kron(I_S, e.T)   (resident)
    eg_ref:   (S*K, W)       f32  E_gather = kron(I_S, e)     (resident)
    esq_ref:  (1, S*K)       f32  0.5*|e_k|^2 tiled per slot  (resident)
    zq_ref:   (tm_p, W)      f32  packed straight-through quantized output
    idx_ref:  (1, tm_p, S)   i32  argmin code indices (natural packed layout)
    loss_ref: (1, 8, 128)    f32  per-step partial sum of (z_q - z)^2
    """
    step = pl.program_id(0)

    z = z_ref[...]                                   # (tm_p, W) f32
    tm_p, w_pack = z.shape
    d_pad = w_pack // slots
    sk = es_ref.shape[1]
    K = sk // slots

    # scores[r, s*K + k] = 0.5*|e_k|^2 - z_row(r*slots+s) . e_k
    # (same argmin as |z - e_k|^2; the row-constant |z|^2 term is dropped).
    ze = lax.dot_general(z.astype(scores_dtype), es_ref[...],
                         dimension_numbers=(((1,), (0,)), ((), ())),
                         preferred_element_type=jnp.float32)      # (tm_p, S*K)
    scores = (esq_ref[...] - ze).astype(scores_dtype)

    lane_k = lax.broadcasted_iota(jnp.int32, (tm_p, K), 1)

    onehot_parts = []
    idx_parts = []
    for s in range(slots):
        # 128-lane, lane-tile-aligned static slice: no relayout.
        seg = scores[:, s * K:(s + 1) * K]                        # (tm_p, K)
        seg_min = jnp.min(seg, axis=1, keepdims=True)             # (tm_p, 1)
        # first-occurrence argmin via masked-iota min (matches torch.argmin).
        cand = jnp.where(seg == seg_min, lane_k, K)
        idx_s = jnp.min(cand, axis=1, keepdims=True)              # (tm_p, 1) i32
        idx_parts.append(idx_s)
        onehot_parts.append((lane_k == idx_s).astype(jnp.float32))

    onehot = jnp.concatenate(onehot_parts, axis=1)                # (tm_p, S*K)
    idx2 = jnp.concatenate(idx_parts, axis=1).astype(jnp.int32)   # (tm_p, S)
    idx_ref[0] = idx2

    # Gather z_q = e[idx] straight into packed layout via one-hot MXU matmul.
    z_q = jnp.dot(onehot, eg_ref[...],
                  preferred_element_type=jnp.float32)             # (tm_p, W)

    diff = z_q - z
    # straight-through estimator forward value: z + (z_q - z).detach() == z_q
    zq_ref[...] = z + diff

    sq = diff * diff
    if need_mask:
        # mask logical rows beyond N (padded D columns are zero in both z and
        # the codebook constants, so they contribute 0 and need no mask).
        rp = lax.broadcasted_iota(jnp.int32, (tm_p, w_pack), 0)
        sl = lax.broadcasted_iota(jnp.int32, (tm_p, w_pack), 1) // d_pad
        n = (step * tm_p + rp) * slots + sl
        sq = jnp.where(n < n_valid, sq, 0.0)
    partial = jnp.sum(sq).astype(jnp.float32)
    loss_ref[...] = jnp.broadcast_to(partial, loss_ref.shape)


@functools.partial(jax.jit, static_argnames=("beta", "tm_max", "use_bf16_scores"))
def codebook_forward(z_nchw, embedding, *, beta, tm_max=2048, use_bf16_scores=None):
    """Forward pass of the VQ-GAN Codebook module.

    z_nchw:    (B, D, H, W) float32   (PyTorch NCHW convention)
    embedding: (K, D)       float32   codebook weights
    returns:   (z_q in NCHW, indices (B*H*W,) int32, loss scalar)
    """
    B, D, H, Wsp = z_nchw.shape
    K, D2 = embedding.shape
    assert D == D2
    assert tm_max % 128 == 0, "tm_max must be a multiple of 128"

    if use_bf16_scores is None:
        use_bf16_scores = _device_supports_bf16_vpu()
    sdt = jnp.bfloat16 if use_bf16_scores else jnp.float32

    d_pad = _pad_dim(D)                      # lane-padded latent dim
    slots = max(1, 128 // d_pad)             # logical rows per packed row
    w_pack = d_pad * slots                   # packed row width (multiple of 128)

    # z.permute(0, 2, 3, 1).contiguous().view(-1, D)
    z_flat = jnp.transpose(z_nchw, (0, 2, 3, 1)).reshape(-1, D)
    N = z_flat.shape[0]

    # Tile size: big enough to amortize per-step overhead, but >=2 grid steps
    # when N allows (so a 'parallel' grid can use both v7x TensorCores).
    tile_align = max(128, 8 * slots)
    half = -(-N // 2)
    tm = min(tm_max, _round_up(max(half, 1), tile_align))
    tm = _round_up(tm, tile_align)
    n_pad = _round_up(N, tm)
    grid = n_pad // tm
    tm_p = tm // slots                       # packed rows per tile
    assert tm % 128 == 0 and tm_p % 8 == 0

    # Zero-pad rows (to n_pad) and columns (to d_pad); free packed reshape.
    if n_pad != N or d_pad != D:
        z_flat = jnp.pad(z_flat, ((0, n_pad - N), (0, d_pad - D)))
    z_packed = z_flat.reshape(n_pad // slots, w_pack)

    # Block-replicated codebook constants (hoisted, resident in VMEM).
    e_pad = embedding.astype(jnp.float32)
    if d_pad != D:
        e_pad = jnp.pad(e_pad, ((0, 0), (0, d_pad - D)))
    eye_s = jnp.eye(slots, dtype=jnp.float32)
    e_score = jnp.kron(eye_s, e_pad.T).astype(sdt)           # (W, S*K)
    e_gather = jnp.kron(eye_s, e_pad)                        # (S*K, W) f32
    esq = 0.5 * jnp.sum(e_pad * e_pad, axis=1)[None, :]      # (1, K)
    esq_tiled = jnp.tile(esq, (1, slots))                    # (1, S*K)

    kernel = functools.partial(_codebook_kernel, slots=slots, n_valid=N,
                               need_mask=(n_pad != N), scores_dtype=sdt)

    # VMEM budget from actual block / constant / temporary sizes.
    es_bytes = w_pack * slots * K * (2 if use_bf16_scores else 4)
    eg_bytes = slots * K * w_pack * 4
    blk = 2 * (2 * tm_p * w_pack * 4 + tm_p * slots * 4 + 8 * 128 * 4)
    res = 2 * (es_bytes + eg_bytes + slots * K * 4)
    tmp = 8 * tm_p * slots * K * 4            # scores / onehot / where temps
    vmem_limit = int(min(max(1.5 * (blk + res + tmp) + (8 << 20), 32 << 20),
                         48 << 20))

    zq_packed, idx3, loss_part = pl.pallas_call(
        kernel,
        out_shape=(
            jax.ShapeDtypeStruct((n_pad // slots, w_pack), jnp.float32),
            jax.ShapeDtypeStruct((grid, tm_p, slots), jnp.int32),
            jax.ShapeDtypeStruct((grid, 8, 128), jnp.float32),
        ),
        grid_spec=pltpu.PrefetchScalarGridSpec(
            num_scalar_prefetch=0,
            grid=(grid,),
            in_specs=[
                pl.BlockSpec((tm_p, w_pack), lambda i: (i, 0)),        # z (packed)
                pl.BlockSpec((w_pack, slots * K), lambda i: (0, 0)),   # E_score
                pl.BlockSpec((slots * K, w_pack), lambda i: (0, 0)),   # E_gather
                pl.BlockSpec((1, slots * K), lambda i: (0, 0)),        # 0.5*|e|^2
            ],
            out_specs=[
                pl.BlockSpec((tm_p, w_pack), lambda i: (i, 0)),        # z_q (packed)
                pl.BlockSpec((1, tm_p, slots), lambda i: (i, 0, 0)),   # indices
                pl.BlockSpec((1, 8, 128), lambda i: (i, 0, 0)),        # loss partials
            ],
        ),
        compiler_params=pltpu.CompilerParams(
            dimension_semantics=("parallel",),   # no carried state
            vmem_limit_bytes=vmem_limit,
        ),
    )(z_packed, e_score, e_gather, esq_tiled)

    # loss = mean((zq.detach()-z)^2) + beta * mean((zq - z.detach())^2)
    #      = (1 + beta) * mean((zq - z)^2)       (forward values are identical)
    sq_sum = jnp.sum(loss_part[:, 0, 0])
    loss = (1.0 + beta) * (sq_sum / jnp.float32(N * D))

    # Unpack (free reshapes), slice padding, permute back to NCHW.
    zq_flat = zq_packed.reshape(n_pad, d_pad)[:N, :D]
    z_q_nchw = jnp.transpose(zq_flat.reshape(B, H, Wsp, D), (0, 3, 1, 2))
    indices = idx3.reshape(-1)[:N]            # int32, logical-row order
    return z_q_nchw, indices, loss


def _check(z, embedding, beta, tm_max):
    z_q, indices, loss = codebook_forward(z, embedding, beta=beta, tm_max=tm_max)
    jax.block_until_ready((z_q, indices, loss))

    B, D, H, W = z.shape
    N = B * H * W

    # float64 numpy reference (exact tie resolution).
    z_np = np.asarray(jnp.transpose(z, (0, 2, 3, 1)).reshape(-1, D),
                      dtype=np.float64)
    e_np = np.asarray(embedding, dtype=np.float64)
    d = ((z_np ** 2).sum(1, keepdims=True) + (e_np ** 2).sum(1)
         - 2.0 * z_np @ e_np.T)                               # (N, K)
    idx_ref = d.argmin(1)
    idx_ker = np.asarray(indices)
    assert idx_ker.shape == (N,)
    assert idx_ker.dtype == np.int32

    # Kernel indices must pick a (near-)optimal code; f32/bf16 rounding on the
    # score path may legitimately resolve near-ties differently than float64.
    row = np.arange(N)
    assert np.all(d[row, idx_ker] <= d[row, idx_ref] + 5e-3)
    assert (idx_ker == idx_ref).mean() >= 0.85

    # z_q (straight-through forward value) must equal e[idx_ker].
    zq_flat = np.asarray(jnp.transpose(z_q, (0, 2, 3, 1)).reshape(-1, D))
    np.testing.assert_allclose(zq_flat, e_np[idx_ker], atol=1e-5, rtol=1e-5)

    # loss = (1 + beta) * mean((z_q - z)^2), evaluated at the kernel's indices.
    loss_ref = (1.0 + beta) * np.mean((e_np[idx_ker] - z_np) ** 2)
    np.testing.assert_allclose(float(loss), loss_ref, rtol=5e-4, atol=1e-6)


if __name__ == "__main__":
    # Module hyper-params
    num_codebook_vectors = 128
    latent_dim = 16
    beta = 0.25

    key = jax.random.PRNGKey(0)
    kz1, kz2, ke = jax.random.split(key, 3)

    # nn.Embedding weight init: uniform(-1/K, 1/K)
    embedding = jax.random.uniform(
        ke, (num_codebook_vectors, latent_dim), dtype=jnp.float32,
        minval=-1.0 / num_codebook_vectors, maxval=1.0 / num_codebook_vectors)

    # Primary config: B=2, 16x16 spatial -> N=512 rows; tm=256 -> 2 grid steps
    # (both v7x TensorCores), no padding.
    z1 = jax.random.normal(kz1, (2, latent_dim, 16, 16), dtype=jnp.float32)
    _check(z1, embedding, beta, tm_max=2048)

    # Second config exercises multi-step grid + row padding/masking:
    # N = 2*13*13 = 338, tm=128 -> 3 grid steps, 46 padded rows.
    z2 = jax.random.normal(kz2, (2, latent_dim, 13, 13), dtype=jnp.float32)
    _check(z2, embedding, beta, tm_max=128)

    print("KERNEL_OK")
</pallas_src>

<mosaic_0001>
module attributes {stable_mosaic.version = 11 : i64} {
  func.func @_codebook_kernel(%arg0: i32, %arg1: memref<32x128xf32, #tpu.memory_space<vmem>>, %arg2: memref<128x1024xf32, #tpu.memory_space<vmem>>, %arg3: memref<1024x128xf32, #tpu.memory_space<vmem>>, %arg4: memref<1x1024xf32, #tpu.memory_space<vmem>>, %arg5: memref<32x128xf32, #tpu.memory_space<vmem>>, %arg6: memref<1x32x8xi32, #tpu.memory_space<vmem>>, %arg7: memref<1x8x128xf32, #tpu.memory_space<vmem>>) attributes {dimension_semantics = [#tpu.dimension_semantics<parallel>], iteration_bounds = array<i64: 2>, scalar_prefetch = 0 : i64, scratch_operands = 0 : i64, tpu.core_type = #tpu.core_type<tc>, window_params = [{transform_indices = @transform_0, window_bounds = array<i64: 32, 128>}, {pipeline_mode = #tpu.pipeline_mode<synchronous>, transform_indices = @transform_1, window_bounds = array<i64: 128, 1024>}, {pipeline_mode = #tpu.pipeline_mode<synchronous>, transform_indices = @transform_2, window_bounds = array<i64: 1024, 128>}, {pipeline_mode = #tpu.pipeline_mode<synchronous>, transform_indices = @transform_3, window_bounds = array<i64: 1, 1024>}, {transform_indices = @transform_4, window_bounds = array<i64: 32, 128>}, {transform_indices = @transform_5, window_bounds = array<i64: 1, 32, 8>}, {transform_indices = @transform_6, window_bounds = array<i64: 1, 8, 128>}]} {
    %c0 = arith.constant 0 : index
    %c0_0 = arith.constant 0 : index
    %0 = vector.load %arg1[%c0, %c0_0] : memref<32x128xf32, #tpu.memory_space<vmem>>, vector<32x128xf32>
    %c0_1 = arith.constant 0 : index
    %c0_2 = arith.constant 0 : index
    %1 = vector.load %arg2[%c0_1, %c0_2] : memref<128x1024xf32, #tpu.memory_space<vmem>>, vector<128x1024xf32>
    %cst = arith.constant dense<0.000000e+00> : vector<32x1024xf32>
    %2 = tpu.matmul %0, %1, %cst {dimension_numbers = #tpu.dot_dimension_numbers<[1], [0], [0], [1], [0, 0, 1, 1], [], []>} : vector<32x128xf32>, vector<128x1024xf32>, vector<32x1024xf32> -> vector<32x1024xf32>
    %c0_3 = arith.constant 0 : index
    %c0_4 = arith.constant 0 : index
    %3 = vector.load %arg4[%c0_3, %c0_4] : memref<1x1024xf32, #tpu.memory_space<vmem>>, vector<1x1024xf32>
    %4 = vector.broadcast %3 : vector<1x1024xf32> to vector<32x1024xf32>
    %5 = arith.subf %4, %2 : vector<32x1024xf32>
    %6 = tpu.iota {dimensions = array<i32: 1>} : vector<32x128xi32>
    %7 = vector.extract_strided_slice %5 {offsets = [0, 0], sizes = [32, 128], strides = [1, 1]} : vector<32x1024xf32> to vector<32x128xf32>
    %cst_5 = arith.constant dense<0x7F800000> : vector<32xf32>
    %8 = vector.multi_reduction <minimumf>, %7, %cst_5 [1] : vector<32x128xf32> to vector<32xf32>
    %9 = vector.shape_cast %8 : vector<32xf32> to vector<32x1xf32>
    %10 = vector.broadcast %9 : vector<32x1xf32> to vector<32x128xf32>
    %11 = arith.cmpf oeq, %7, %10 : vector<32x128xf32>
    %c128_i32 = arith.constant 128 : i32
    %12 = vector.broadcast %c128_i32 : i32 to vector<32x128xi32>
    %13 = arith.select %11, %6, %12 : vector<32x128xi1>, vector<32x128xi32>
    %cst_6 = arith.constant dense<2147483647> : vector<32xi32>
    %14 = vector.multi_reduction <minsi>, %13, %cst_6 [1] : vector<32x128xi32> to vector<32xi32>
    %15 = vector.shape_cast %14 : vector<32xi32> to vector<32x1xi32>
    %16 = vector.broadcast %15 : vector<32x1xi32> to vector<32x128xi32>
    %17 = arith.cmpi eq, %6, %16 : vector<32x128xi32>
    %18 = arith.extui %17 : vector<32x128xi1> to vector<32x128xi32>
    %19 = arith.sitofp %18 : vector<32x128xi32> to vector<32x128xf32>
    %20 = vector.extract_strided_slice %5 {offsets = [0, 128], sizes = [32, 128], strides = [1, 1]} : vector<32x1024xf32> to vector<32x128xf32>
    %cst_7 = arith.constant dense<0x7F800000> : vector<32xf32>
    %21 = vector.multi_reduction <minimumf>, %20, %cst_7 [1] : vector<32x128xf32> to vector<32xf32>
    %22 = vector.shape_cast %21 : vector<32xf32> to vector<32x1xf32>
    %23 = vector.broadcast %22 : vector<32x1xf32> to vector<32x128xf32>
    %24 = arith.cmpf oeq, %20, %23 : vector<32x128xf32>
    %c128_i32_8 = arith.constant 128 : i32
    %25 = vector.broadcast %c128_i32_8 : i32 to vector<32x128xi32>
    %26 = arith.select %24, %6, %25 : vector<32x128xi1>, vector<32x128xi32>
    %cst_9 = arith.constant dense<2147483647> : vector<32xi32>
    %27 = vector.multi_reduction <minsi>, %26, %cst_9 [1] : vector<32x128xi32> to vector<32xi32>
    %28 = vector.shape_cast %27 : vector<32xi32> to vector<32x1xi32>
    %29 = vector.broadcast %28 : vector<32x1xi32> to vector<32x128xi32>
    %30 = arith.cmpi eq, %6, %29 : vector<32x128xi32>
    %31 = arith.extui %30 : vector<32x128xi1> to vector<32x128xi32>
    %32 = arith.sitofp %31 : vector<32x128xi32> to vector<32x128xf32>
    %33 = vector.extract_strided_slice %5 {offsets = [0, 256], sizes = [32, 128], strides = [1, 1]} : vector<32x1024xf32> to vector<32x128xf32>
    %cst_10 = arith.constant dense<0x7F800000> : vector<32xf32>
    %34 = vector.multi_reduction <minimumf>, %33, %cst_10 [1] : vector<32x128xf32> to vector<32xf32>
    %35 = vector.shape_cast %34 : vector<32xf32> to vector<32x1xf32>
    %36 = vector.broadcast %35 : vector<32x1xf32> to vector<32x128xf32>
    %37 = arith.cmpf oeq, %33, %36 : vector<32x128xf32>
    %c128_i32_11 = arith.constant 128 : i32
    %38 = vector.broadcast %c128_i32_11 : i32 to vector<32x128xi32>
    %39 = arith.select %37, %6, %38 : vector<32x128xi1>, vector<32x128xi32>
    %cst_12 = arith.constant dense<2147483647> : vector<32xi32>
    %40 = vector.multi_reduction <minsi>, %39, %cst_12 [1] : vector<32x128xi32> to vector<32xi32>
    %41 = vector.shape_cast %40 : vector<32xi32> to vector<32x1xi32>
    %42 = vector.broadcast %41 : vector<32x1xi32> to vector<32x128xi32>
    %43 = arith.cmpi eq, %6, %42 : vector<32x128xi32>
    %44 = arith.extui %43 : vector<32x128xi1> to vector<32x128xi32>
    %45 = arith.sitofp %44 : vector<32x128xi32> to vector<32x128xf32>
    %46 = vector.extract_strided_slice %5 {offsets = [0, 384], sizes = [32, 128], strides = [1, 1]} : vector<32x1024xf32> to vector<32x128xf32>
    %cst_13 = arith.constant dense<0x7F800000> : vector<32xf32>
    %47 = vector.multi_reduction <minimumf>, %46, %cst_13 [1] : vector<32x128xf32> to vector<32xf32>
    %48 = vector.shape_cast %47 : vector<32xf32> to vector<32x1xf32>
    %49 = vector.broadcast %48 : vector<32x1xf32> to vector<32x128xf32>
    %50 = arith.cmpf oeq, %46, %49 : vector<32x128xf32>
    %c128_i32_14 = arith.constant 128 : i32
    %51 = vector.broadcast %c128_i32_14 : i32 to vector<32x128xi32>
    %52 = arith.select %50, %6, %51 : vector<32x128xi1>, vector<32x128xi32>
    %cst_15 = arith.constant dense<2147483647> : vector<32xi32>
    %53 = vector.multi_reduction <minsi>, %52, %cst_15 [1] : vector<32x128xi32> to vector<32xi32>
    %54 = vector.shape_cast %53 : vector<32xi32> to vector<32x1xi32>
    %55 = vector.broadcast %54 : vector<32x1xi32> to vector<32x128xi32>
    %56 = arith.cmpi eq, %6, %55 : vector<32x128xi32>
    %57 = arith.extui %56 : vector<32x128xi1> to vector<32x128xi32>
    %58 = arith.sitofp %57 : vector<32x128xi32> to vector<32x128xf32>
    %59 = vector.extract_strided_slice %5 {offsets = [0, 512], sizes = [32, 128], strides = [1, 1]} : vector<32x1024xf32> to vector<32x128xf32>
    %cst_16 = arith.constant dense<0x7F800000> : vector<32xf32>
    %60 = vector.multi_reduction <minimumf>, %59, %cst_16 [1] : vector<32x128xf32> to vector<32xf32>
    %61 = vector.shape_cast %60 : vector<32xf32> to vector<32x1xf32>
    %62 = vector.broadcast %61 : vector<32x1xf32> to vector<32x128xf32>
    %63 = arith.cmpf oeq, %59, %62 : vector<32x128xf32>
    %c128_i32_17 = arith.constant 128 : i32
    %64 = vector.broadcast %c128_i32_17 : i32 to vector<32x128xi32>
    %65 = arith.select %63, %6, %64 : vector<32x128xi1>, vector<32x128xi32>
    %cst_18 = arith.constant dense<2147483647> : vector<32xi32>
    %66 = vector.multi_reduction <minsi>, %65, %cst_18 [1] : vector<32x128xi32> to vector<32xi32>
    %67 = vector.shape_cast %66 : vector<32xi32> to vector<32x1xi32>
    %68 = vector.broadcast %67 : vector<32x1xi32> to vector<32x128xi32>
    %69 = arith.cmpi eq, %6, %68 : vector<32x128xi32>
    %70 = arith.extui %69 : vector<32x128xi1> to vector<32x128xi32>
    %71 = arith.sitofp %70 : vector<32x128xi32> to vector<32x128xf32>
    %72 = vector.extract_strided_slice %5 {offsets = [0, 640], sizes = [32, 128], strides = [1, 1]} : vector<32x1024xf32> to vector<32x128xf32>
    %cst_19 = arith.constant dense<0x7F800000> : vector<32xf32>
    %73 = vector.multi_reduction <minimumf>, %72, %cst_19 [1] : vector<32x128xf32> to vector<32xf32>
    %74 = vector.shape_cast %73 : vector<32xf32> to vector<32x1xf32>
    %75 = vector.broadcast %74 : vector<32x1xf32> to vector<32x128xf32>
    %76 = arith.cmpf oeq, %72, %75 : vector<32x128xf32>
    %c128_i32_20 = arith.constant 128 : i32
    %77 = vector.broadcast %c128_i32_20 : i32 to vector<32x128xi32>
    %78 = arith.select %76, %6, %77 : vector<32x128xi1>, vector<32x128xi32>
    %cst_21 = arith.constant dense<2147483647> : vector<32xi32>
    %79 = vector.multi_reduction <minsi>, %78, %cst_21 [1] : vector<32x128xi32> to vector<32xi32>
    %80 = vector.shape_cast %79 : vector<32xi32> to vector<32x1xi32>
    %81 = vector.broadcast %80 : vector<32x1xi32> to vector<32x128xi32>
    %82 = arith.cmpi eq, %6, %81 : vector<32x128xi32>
    %83 = arith.extui %82 : vector<32x128xi1> to vector<32x128xi32>
    %84 = arith.sitofp %83 : vector<32x128xi32> to vector<32x128xf32>
    %85 = vector.extract_strided_slice %5 {offsets = [0, 768], sizes = [32, 128], strides = [1, 1]} : vector<32x1024xf32> to vector<32x128xf32>
    %cst_22 = arith.constant dense<0x7F800000> : vector<32xf32>
    %86 = vector.multi_reduction <minimumf>, %85, %cst_22 [1] : vector<32x128xf32> to vector<32xf32>
    %87 = vector.shape_cast %86 : vector<32xf32> to vector<32x1xf32>
    %88 = vector.broadcast %87 : vector<32x1xf32> to vector<32x128xf32>
    %89 = arith.cmpf oeq, %85, %88 : vector<32x128xf32>
    %c128_i32_23 = arith.constant 128 : i32
    %90 = vector.broadcast %c128_i32_23 : i32 to vector<32x128xi32>
    %91 = arith.select %89, %6, %90 : vector<32x128xi1>, vector<32x128xi32>
    %cst_24 = arith.constant dense<2147483647> : vector<32xi32>
    %92 = vector.multi_reduction <minsi>, %91, %cst_24 [1] : vector<32x128xi32> to vector<32xi32>
    %93 = vector.shape_cast %92 : vector<32xi32> to vector<32x1xi32>
    %94 = vector.broadcast %93 : vector<32x1xi32> to vector<32x128xi32>
    %95 = arith.cmpi eq, %6, %94 : vector<32x128xi32>
    %96 = arith.extui %95 : vector<32x128xi1> to vector<32x128xi32>
    %97 = arith.sitofp %96 : vector<32x128xi32> to vector<32x128xf32>
    %98 = vector.extract_strided_slice %5 {offsets = [0, 896], sizes = [32, 128], strides = [1, 1]} : vector<32x1024xf32> to vector<32x128xf32>
    %cst_25 = arith.constant dense<0x7F800000> : vector<32xf32>
    %99 = vector.multi_reduction <minimumf>, %98, %cst_25 [1] : vector<32x128xf32> to vector<32xf32>
    %100 = vector.shape_cast %99 : vector<32xf32> to vector<32x1xf32>
    %101 = vector.broadcast %100 : vector<32x1xf32> to vector<32x128xf32>
    %102 = arith.cmpf oeq, %98, %101 : vector<32x128xf32>
    %c128_i32_26 = arith.constant 128 : i32
    %103 = vector.broadcast %c128_i32_26 : i32 to vector<32x128xi32>
    %104 = arith.select %102, %6, %103 : vector<32x128xi1>, vector<32x128xi32>
    %cst_27 = arith.constant dense<2147483647> : vector<32xi32>
    %105 = vector.multi_reduction <minsi>, %104, %cst_27 [1] : vector<32x128xi32> to vector<32xi32>
    %106 = vector.shape_cast %105 : vector<32xi32> to vector<32x1xi32>
    %107 = vector.broadcast %106 : vector<32x1xi32> to vector<32x128xi32>
    %108 = arith.cmpi eq, %6, %107 : vector<32x128xi32>
    %109 = arith.extui %108 : vector<32x128xi1> to vector<32x128xi32>
    %110 = arith.sitofp %109 : vector<32x128xi32> to vector<32x128xf32>
    %111 = tpu.concatenate %19, %32, %45, %58, %71, %84, %97, %110 in 1 : vector<32x128xf32>, vector<32x128xf32>, vector<32x128xf32>, vector<32x128xf32>, vector<32x128xf32>, vector<32x128xf32>, vector<32x128xf32>, vector<32x128xf32> -> vector<32x1024xf32>
    %112 = tpu.concatenate %15, %28, %41, %54, %67, %80, %93, %106 in 1 : vector<32x1xi32>, vector<32x1xi32>, vector<32x1xi32>, vector<32x1xi32>, vector<32x1xi32>, vector<32x1xi32>, vector<32x1xi32>, vector<32x1xi32> -> vector<32x8xi32>
    %c0_28 = arith.constant 0 : index
    %c0_29 = arith.constant 0 : index
    %c0_30 = arith.constant 0 : index
    %113 = vector.load %arg6[%c0_28, %c0_29, %c0_30] : memref<1x32x8xi32, #tpu.memory_space<vmem>>, vector<1x32x8xi32>
    %114 = vector.shape_cast %113 : vector<1x32x8xi32> to vector<32x8xi32>
    %115 = vector.shape_cast %112 : vector<32x8xi32> to vector<1x32x8xi32>
    tpu.vector_store %arg6[%c0_28, %c0_29, %c0_30], %115 {strides = array<i32>} : memref<1x32x8xi32, #tpu.memory_space<vmem>>, vector<1x32x8xi32>,
    %c0_31 = arith.constant 0 : index
    %c0_32 = arith.constant 0 : index
    %116 = vector.load %arg3[%c0_31, %c0_32] : memref<1024x128xf32, #tpu.memory_space<vmem>>, vector<1024x128xf32>
    %cst_33 = arith.constant dense<0.000000e+00> : vector<32x128xf32>
    %117 = tpu.matmul %111, %116, %cst_33 {dimension_numbers = #tpu.dot_dimension_numbers<[1], [0], [0], [1], [0, 0, 1, 1], [], []>} : vector<32x1024xf32>, vector<1024x128xf32>, vector<32x128xf32> -> vector<32x128xf32>
    %118 = arith.subf %117, %0 : vector<32x128xf32>
    %119 = arith.addf %0, %118 : vector<32x128xf32>
    %c0_34 = arith.constant 0 : index
    %c0_35 = arith.constant 0 : index
    %120 = vector.load %arg5[%c0_34, %c0_35] : memref<32x128xf32, #tpu.memory_space<vmem>>, vector<32x128xf32>
    tpu.vector_store %arg5[%c0_34, %c0_35], %119 {strides = array<i32>} : memref<32x128xf32, #tpu.memory_space<vmem>>, vector<32x128xf32>,
    %121 = arith.mulf %118, %118 : vector<32x128xf32>
    %122 = vector.shape_cast %121 : vector<32x128xf32> to vector<1x32x128xf32>
    %cst_36 = arith.constant dense<0.000000e+00> : vector<1xf32>
    %123 = vector.multi_reduction <add>, %122, %cst_36 [1, 2] : vector<1x32x128xf32> to vector<1xf32>
    %124 = vector.shape_cast %123 : vector<1xf32> to vector<1x1x1xf32>
    %125 = vector.extract %124[0, 0, 0] : f32 from vector<1x1x1xf32>
    %126 = vector.broadcast %125 : f32 to vector<1x8x128xf32>
    %c0_37 = arith.constant 0 : index
    %c0_38 = arith.constant 0 : index
    %c0_39 = arith.constant 0 : index
    %127 = vector.load %arg7[%c0_37, %c0_38, %c0_39] : memref<1x8x128xf32, #tpu.memory_space<vmem>>, vector<1x8x128xf32>
    tpu.vector_store %arg7[%c0_37, %c0_38, %c0_39], %126 {strides = array<i32>} : memref<1x8x128xf32, #tpu.memory_space<vmem>>, vector<1x8x128xf32>,
    return
  }
  func.func @transform_0(%arg0: i32) -> (i32, i32) {
    %c0_i32 = arith.constant 0 : i32
    %c0_i32_0 = arith.constant 0 : i32
    return %arg0, %c0_i32 : i32, i32
  }
  func.func @transform_1(%arg0: i32) -> (i32, i32) {
    %c0_i32 = arith.constant 0 : i32
    %c0_i32_0 = arith.constant 0 : i32
    %c0_i32_1 = arith.constant 0 : i32
    return %c0_i32, %c0_i32_0 : i32, i32
  }
  func.func @transform_2(%arg0: i32) -> (i32, i32) {
    %c0_i32 = arith.constant 0 : i32
    %c0_i32_0 = arith.constant 0 : i32
    %c0_i32_1 = arith.constant 0 : i32
    return %c0_i32, %c0_i32_0 : i32, i32
  }
  func.func @transform_3(%arg0: i32) -> (i32, i32) {
    %c0_i32 = arith.constant 0 : i32
    %c0_i32_0 = arith.constant 0 : i32
    %c0_i32_1 = arith.constant 0 : i32
    return %c0_i32, %c0_i32_0 : i32, i32
  }
  func.func @transform_4(%arg0: i32) -> (i32, i32) {
    %c0_i32 = arith.constant 0 : i32
    %c0_i32_0 = arith.constant 0 : i32
    return %arg0, %c0_i32 : i32, i32
  }
  func.func @transform_5(%arg0: i32) -> (i32, i32, i32) {
    %c0_i32 = arith.constant 0 : i32
    %c0_i32_0 = arith.constant 0 : i32
    %c0_i32_1 = arith.constant 0 : i32
    return %arg0, %c0_i32, %c0_i32_0 : i32, i32, i32
  }
  func.func @transform_6(%arg0: i32) -> (i32, i32, i32) {
    %c0_i32 = arith.constant 0 : i32
    %c0_i32_0 = arith.constant 0 : i32
    %c0_i32_1 = arith.constant 0 : i32
    return %arg0, %c0_i32, %c0_i32_0 : i32, i32, i32
  }
}

</mosaic_0001>

<llo_original>
// kernel: codebook_forward.1
$region0: #{codebook_forward.1}
  #allocation0 [shape = 'u32[]', space=smem, size = 0x4, offset = 0x4, fixed_abs, tag = 'smem constant byte address 0x4 - core index']
  #allocation1 [shape = 'u32[72,128]{1,0:T(1,128)}', space=vmem, size = 0x9000, scoped, tag = 'internal scratch']
  %s0 = inlined_call_operand.vmem [shape: f32[64,128], index: 0, kind: input, shape index: {}]
  %s1 = inlined_call_operand.vmem [shape: f32[128,1024], index: 1, kind: input, shape index: {}]
  %s2 = inlined_call_operand.vmem [shape: f32[1024,128], index: 2, kind: input, shape index: {}]
  %s3 = inlined_call_operand.vmem [shape: f32[1,1024], index: 3, kind: input, shape index: {}]
  %s4 = inlined_call_operand.vmem [shape: f32[64,128], index: 4, kind: output, shape index: {0}]
  %s5 = inlined_call_operand.vmem [shape: s32[2,32,8], index: 5, kind: output, shape index: {1}]
  %s6 = inlined_call_operand.vmem [shape: f32[2,8,128], index: 6, kind: output, shape index: {2}]
  %7 = xla_tuple %s4, %s5, %s6
  %s8 = sld [smem:[#allocation0]]
  $region65: #{codebook_forward.1} parent=0
    _
  %s10 = ssub.s32 1, %s8
  %s11 = scalar_select 0, %s10, %s8
  loop: start=0, step=1, limit=4
  $region2: #{codebook_forward.1} parent=0 // loop_pre_header
    _
  $region3: #{codebook_forward.1} parent=0 // loop_header
    %s13 = sphi 0, %s17
    %p14 = scmp.ge.s32.totalorder %s13, 4
    %s23 = sphi 0, %s25
    %s26 = sphi 0, %s23
    %s27 = sphi 0, %s26
    %s43 = sphi 0, %s27
    %s47 = sphi 0, %s47
    %s49 = sphi 0, %s47
    %s50 = sphi 0, %s49
    %s64 = sphi 0, %s50
    %s68 = sphi 0, %s68
    %s70 = sphi 0, %s68
    %s71 = sphi 0, %s70
    %s85 = sphi 0, %s71
    %s89 = sphi 0, %s89
    %s91 = sphi 0, %s89
    %s92 = sphi 0, %s91
    %s106 = sphi 0, %s92
    %s112 = sphi 0, %s114
    %s115 = sphi 0, %s112
    %s116 = sphi 0, %s115
    %s132 = sphi 0, %s116
    %s138 = sphi 0, %s140
    %s141 = sphi 0, %s138
    %s142 = sphi 0, %s141
    %s158 = sphi 0, %s142
    %s164 = sphi 0, %s166
    %s167 = sphi 0, %s164
    %s168 = sphi 0, %s167
    %s184 = sphi 0, %s168
  $region4: #{codebook_forward.1} parent=0 // loop_header_branch
    %16 = sbr.rel (%p14) target = $region8
  $region5: #{codebook_forward.1} parent=0 // loop_body
    %s18 = ssub.s32 %s13, 1
    %s19 = ssub.s32 %s13, 2
    %s20 = sadd.s32 %s13, 1
    %s21 = ssub.s32 %s13, %s20
    %p22 = scmp.eq.s32.totalorder %s21, 0
    %s24 = sadd.s32 %s23, 1
    %s25 = scalar_select %p22, %s23, %s24
    %p28 = pneg %p22
    %p29 = scmp.eq.s32.totalorder %s13, 1
    %p30 = por %p28, %p29
    %p31 = scmp.ne.s32.totalorder %s23, %s26
    %p32 = scmp.eq.s32.totalorder %s13, 0
    %p33 = por %p31, %p32
    %p34 = scmp.ne.s32.totalorder %s23, %s26
    %p35 = scmp.eq.s32.totalorder %s18, 1
    %p36 = por %p34, %p35
    %p37 = scmp.ne.s32.totalorder %s26, %s27
    %p38 = scmp.eq.s32.totalorder %s18, 0
    %p39 = por %p37, %p38
    %p40 = scmp.ne.s32.totalorder %s26, %s27
    %p41 = scmp.eq.s32.totalorder %s19, 1
    %p42 = por %p40, %p41
    %p44 = scmp.ne.s32.totalorder %s27, %s43
    %p45 = scmp.eq.s32.totalorder %s19, 0
    %p46 = por %p44, %p45
    %s48 = sadd.s32 %s47, 1
    %p51 = scmp.eq.s32.totalorder %s13, 1
    %p52 = scmp.ne.s32.totalorder %s47, %s49
    %p53 = scmp.eq.s32.totalorder %s13, 0
    %p54 = por %p52, %p53
    %p55 = scmp.ne.s32.totalorder %s47, %s49
    %p56 = scmp.eq.s32.totalorder %s18, 1
    %p57 = por %p55, %p56
    %p58 = scmp.ne.s32.totalorder %s49, %s50
    %p59 = scmp.eq.s32.totalorder %s18, 0
    %p60 = por %p58, %p59
    %p61 = scmp.ne.s32.totalorder %s49, %s50
    %p62 = scmp.eq.s32.totalorder %s19, 1
    %p63 = por %p61, %p62
    %p65 = scmp.ne.s32.totalorder %s50, %s64
    %p66 = scmp.eq.s32.totalorder %s19, 0
    %p67 = por %p65, %p66
    %s69 = sadd.s32 %s68, 1
    %p72 = scmp.eq.s32.totalorder %s13, 1
    %p73 = scmp.ne.s32.totalorder %s68, %s70
    %p74 = scmp.eq.s32.totalorder %s13, 0
    %p75 = por %p73, %p74
    %p76 = scmp.ne.s32.totalorder %s68, %s70
    %p77 = scmp.eq.s32.totalorder %s18, 1
    %p78 = por %p76, %p77
    %p79 = scmp.ne.s32.totalorder %s70, %s71
    %p80 = scmp.eq.s32.totalorder %s18, 0
    %p81 = por %p79, %p80
    %p82 = scmp.ne.s32.totalorder %s70, %s71
    %p83 = scmp.eq.s32.totalorder %s19, 1
    %p84 = por %p82, %p83
    %p86 = scmp.ne.s32.totalorder %s71, %s85
    %p87 = scmp.eq.s32.totalorder %s19, 0
    %p88 = por %p86, %p87
    %s90 = sadd.s32 %s89, 1
    %p93 = scmp.eq.s32.totalorder %s13, 1
    %p94 = scmp.ne.s32.totalorder %s89, %s91
    %p95 = scmp.eq.s32.totalorder %s13, 0
    %p96 = por %p94, %p95
    %p97 = scmp.ne.s32.totalorder %s89, %s91
    %p98 = scmp.eq.s32.totalorder %s18, 1
    %p99 = por %p97, %p98
    %p100 = scmp.ne.s32.totalorder %s91, %s92
    %p101 = scmp.eq.s32.totalorder %s18, 0
    %p102 = por %p100, %p101
    %p103 = scmp.ne.s32.totalorder %s91, %s92
    %p104 = scmp.eq.s32.totalorder %s19, 1
    %p105 = por %p103, %p104
    %p107 = scmp.ne.s32.totalorder %s92, %s106
    %p108 = scmp.eq.s32.totalorder %s19, 0
    %p109 = por %p107, %p108
    %s110 = ssub.s32 %s13, %s20
    %p111 = scmp.eq.s32.totalorder %s110, 0
    %s113 = sadd.s32 %s112, 1
    %s114 = scalar_select %p111, %s112, %s113
    %p117 = pneg %p111
    %p118 = scmp.eq.s32.totalorder %s13, 1
    %p119 = por %p117, %p118
    %p120 = scmp.ne.s32.totalorder %s112, %s115
    %p121 = scmp.eq.s32.totalorder %s13, 0
    %p122 = por %p120, %p121
    %p123 = scmp.ne.s32.totalorder %s112, %s115
    %p124 = scmp.eq.s32.totalorder %s18, 1
    %p125 = por %p123, %p124
    %p126 = scmp.ne.s32.totalorder %s115, %s116
    %p127 = scmp.eq.s32.totalorder %s18, 0
    %p128 = por %p126, %p127
    %p129 = scmp.ne.s32.totalorder %s115, %s116
    %p130 = scmp.eq.s32.totalorder %s19, 1
    %p131 = por %p129, %p130
    %p133 = scmp.ne.s32.totalorder %s116, %s132
    %p134 = scmp.eq.s32.totalorder %s19, 0
    %p135 = por %p133, %p134
    %s136 = ssub.s32 %s13, %s20
    %p137 = scmp.eq.s32.totalorder %s136, 0
    %s139 = sadd.s32 %s138, 1
    %s140 = scalar_select %p137, %s138, %s139
    %p143 = pneg %p137
    %p144 = scmp.eq.s32.totalorder %s13, 1
    %p145 = por %p143, %p144
    %p146 = scmp.ne.s32.totalorder %s138, %s141
    %p147 = scmp.eq.s32.totalorder %s13, 0
    %p148 = por %p146, %p147
    %p149 = scmp.ne.s32.totalorder %s138, %s141
    %p150 = scmp.eq.s32.totalorder %s18, 1
    %p151 = por %p149, %p150
    %p152 = scmp.ne.s32.totalorder %s141, %s142
    %p153 = scmp.eq.s32.totalorder %s18, 0
    %p154 = por %p152, %p153
    %p155 = scmp.ne.s32.totalorder %s141, %s142
    %p156 = scmp.eq.s32.totalorder %s19, 1
    %p157 = por %p155, %p156
    %p159 = scmp.ne.s32.totalorder %s142, %s158
    %p160 = scmp.eq.s32.totalorder %s19, 0
    %p161 = por %p159, %p160
    %s162 = ssub.s32 %s13, %s20
    %p163 = scmp.eq.s32.totalorder %s162, 0
    %s165 = sadd.s32 %s164, 1
    %s166 = scalar_select %p163, %s164, %s165
    %p169 = pneg %p163
    %p170 = scmp.eq.s32.totalorder %s13, 1
    %p171 = por %p169, %p170
    %p172 = scmp.ne.s32.totalorder %s164, %s167
    %p173 = scmp.eq.s32.totalorder %s13, 0
    %p174 = por %p172, %p173
    %p175 = scmp.ne.s32.totalorder %s164, %s167
    %p176 = scmp.eq.s32.totalorder %s18, 1
    %p177 = por %p175, %p176
    %p178 = scmp.ne.s32.totalorder %s167, %s168
    %p179 = scmp.eq.s32.totalorder %s18, 0
    %p180 = por %p178, %p179
    %p181 = scmp.ne.s32.totalorder %s167, %s168
    %p182 = scmp.eq.s32.totalorder %s19, 1
    %p183 = por %p181, %p182
    %p185 = scmp.ne.s32.totalorder %s168, %s184
    %p186 = scmp.eq.s32.totalorder %s19, 0
    %p187 = por %p185, %p186
    %p188 = scmp.le.s32.totalorder 1, %s13
    %p189 = scmp.lt.s32.totalorder %s13, 3
    %p190 = pnand %p188, %p189
    %p191 = pneg %p190
    // Predicated region
    $region9: #{codebook_forward.1} parent=5 // pred_check
      _
    $region10: #{codebook_forward.1} parent=5 // pred_check_branch
      %193 = sbr.rel (%p190) target = $region12
    $region11: #{codebook_forward.1} parent=5 // pred_region
      %s194 = ssub.s32 %s13, 1
      // Predicated region
      $region13: #{codebook_forward.1} parent=11 // pred_check
        %p195 = pneg %p60
      $region14: #{codebook_forward.1} parent=11 // pred_check_branch
        %197 = sbr.rel (%p195) target = $region16
      $region15: #{codebook_forward.1} parent=11 // pred_region
        _
      $region16: #{codebook_forward.1} parent=11 // pred_fallthru
        _
      // Predicated region
      $region17: #{codebook_forward.1} parent=11 // pred_check
        %p198 = pneg %p81
      $region18: #{codebook_forward.1} parent=11 // pred_check_branch
        %200 = sbr.rel (%p198) target = $region20
      $region19: #{codebook_forward.1} parent=11 // pred_region
        _
      $region20: #{codebook_forward.1} parent=11 // pred_fallthru
        _
      // Predicated region
      $region21: #{codebook_forward.1} parent=11 // pred_check
        %p201 = pneg %p102
      $region22: #{codebook_forward.1} parent=11 // pred_check_branch
        %203 = sbr.rel (%p201) target = $region24
      $region23: #{codebook_forward.1} parent=11 // pred_region
        _
      $region24: #{codebook_forward.1} parent=11 // pred_fallthru
        _
    $region12: #{codebook_forward.1} parent=5 // pred_fallthru
      _
    %p204 = scmp.lt.s32.totalorder %s13, 2
    // Predicated region
    $region25: #{codebook_forward.1} parent=5 // pred_check
      %p205 = pneg %p204
    $region26: #{codebook_forward.1} parent=5 // pred_check_branch
      %207 = sbr.rel (%p205) target = $region28
    $region27: #{codebook_forward.1} parent=5 // pred_region
      // Predicated region
      $region29: #{codebook_forward.1} parent=27 // pred_check
        %p208 = pneg %p33
      $region30: #{codebook_forward.1} parent=27 // pred_check_branch
        %210 = sbr.rel (%p208) target = $region32
      $region31: #{codebook_forward.1} parent=27 // pred_region
        %s211 = smul.u32 4, %s13
        %p212 = scmp.lt.s32.totalorder %s211, 7
        %s213 = scalar_select %p212, %s211, 7
        %s214 = smul.addr %s213, 8
        %s215 = scalar_lea.vmem %s0, %s214
        %s216 = smul.u32 4, %s13
      $region32: #{codebook_forward.1} parent=27 // pred_fallthru
        _
    $region28: #{codebook_forward.1} parent=5 // pred_fallthru
      _
    %p217 = scmp.le.s32.totalorder 1, %s13
    %p218 = scmp.lt.s32.totalorder %s13, 3
    %p219 = pnand %p217, %p218
    %p220 = pneg %p219
    // Predicated region
    $region33: #{codebook_forward.1} parent=5 // pred_check
      _
    $region34: #{codebook_forward.1} parent=5 // pred_check_branch
      %222 = sbr.rel (%p219) target = $region36
    $region35: #{codebook_forward.1} parent=5 // pred_region
      %s223 = ssub.s32 %s13, 1
      %s224 = smul.u32 4, %s18
      %p225 = scmp.lt.s32.totalorder %s224, 7
      %s226 = scalar_select %p225, %s224, 7
      %s227 = smul.addr %s226, 8
      %s228 = scalar_lea.vmem %s0, %s227
      %p229 = pneg %p39
      %p230 = pneg %p36
      %p231 = pneg %p60
      %p232 = pneg %p57
      %p233 = pneg %p81
      %p234 = pneg %p78
      %p235 = pneg %p102
      %p236 = pneg %p99
      %p237 = pneg %p128
      %p238 = pneg %p125
      %s239 = smul.u32 4, %s18
      %p240 = scmp.lt.s32.totalorder %s239, 7
      %s241 = scalar_select %p240, %s239, 7
      %s242 = smul.addr %s241, 8
      %s243 = scalar_lea.vmem %s4, %s242
      %p244 = pneg %p154
      %p245 = pneg %p151
      %p246 = scmp.lt.s32.totalorder %s18, 1
      %s247 = scalar_select %p246, %s18, 1
      %s248 = smul.addr %s247, 4
      %s249 = smul.addr %s248, 8
      %s250 = scalar_lea.vmem %s5, %s249
      %p251 = pneg %p180
      %p252 = pneg %p177
      %p253 = scmp.lt.s32.totalorder %s18, 1
      %s254 = scalar_select %p253, %s18, 1
      %s255 = smul.addr %s254, 8
      %s256 = scalar_lea.vmem %s6, %s255
      %s257 = smul.u32 4, %s18
      %p258 = scmp.lt.s32.totalorder %s257, 7
      %s259 = scalar_select %p258, %s257, 7
      %s260 = smul.addr %s259, 8
      %s261 = scalar_lea.vmem %s0, %s260
      %s262 = smul.u32 4, %s18
      %s263 = smul.u32 4, %s18
      %p264 = scmp.lt.s32.totalorder %s263, 7
      %s265 = scalar_select %p264, %s263, 7
      %s266 = smul.addr %s265, 8
      %s267 = scalar_lea.vmem %s4, %s266
      %s268 = smul.u32 4, %s18
      %p269 = scmp.lt.s32.totalorder %s18, 1
      %s270 = scalar_select %p269, %s18, 1
      %s271 = smul.addr %s270, 4
      %s272 = smul.addr %s271, 8
      %s273 = scalar_lea.vmem %s5, %s272
      %p274 = scmp.lt.s32.totalorder %s18, 1
      %s275 = scalar_select %p274, %s18, 1
      %s276 = smul.addr %s275, 8
      %s277 = scalar_lea.vmem %s6, %s276
      %v278 = vld [vmem:[%s261] sm:$0xff]
      %v279 = vld [vmem:[%s261 + $0x8] sm:$0xff]
      %v280 = vld [vmem:[%s261 + $0x10] sm:$0xff]
      %v281 = vld [vmem:[%s261 + $0x18] sm:$0xff]
      %v282 = vld [vmem:[%s1] sm:$0xff]
      %v283 = vld [vmem:[%s1 + $0x8] sm:$0xff]
      %v284 = vld [vmem:[%s1 + $0x10] sm:$0xff]
      %v285 = vld [vmem:[%s1 + $0x18] sm:$0xff]
      %v286 = vld [vmem:[%s1 + $0x20] sm:$0xff]
      %v287 = vld [vmem:[%s1 + $0x28] sm:$0xff]
      %v288 = vld [vmem:[%s1 + $0x30] sm:$0xff]
      %v289 = vld [vmem:[%s1 + $0x38] sm:$0xff]
      %v290 = vld [vmem:[%s1 + $0x40] sm:$0xff]
      %v291 = vld [vmem:[%s1 + $0x48] sm:$0xff]
      %v292 = vld [vmem:[%s1 + $0x50] sm:$0xff]
      %v293 = vld [vmem:[%s1 + $0x58] sm:$0xff]
      %v294 = vld [vmem:[%s1 + $0x60] sm:$0xff]
      %v295 = vld [vmem:[%s1 + $0x68] sm:$0xff]
      %v296 = vld [vmem:[%s1 + $0x70] sm:$0xff]
      %v297 = vld [vmem:[%s1 + $0x78] sm:$0xff]
      %v298 = vld [vmem:[%s1 + $0x80] sm:$0xff]
      %v299 = vld [vmem:[%s1 + $0x88] sm:$0xff]
      %v300 = vld [vmem:[%s1 + $0x90] sm:$0xff]
      %v301 = vld [vmem:[%s1 + $0x98] sm:$0xff]
      %v302 = vld [vmem:[%s1 + $0xa0] sm:$0xff]
      %v303 = vld [vmem:[%s1 + $0xa8] sm:$0xff]
      %v304 = vld [vmem:[%s1 + $0xb0] sm:$0xff]
      %v305 = vld [vmem:[%s1 + $0xb8] sm:$0xff]
      %v306 = vld [vmem:[%s1 + $0xc0] sm:$0xff]
      %v307 = vld [vmem:[%s1 + $0xc8] sm:$0xff]
      %v308 = vld [vmem:[%s1 + $0xd0] sm:$0xff]
      %v309 = vld [vmem:[%s1 + $0xd8] sm:$0xff]
      %v310 = vld [vmem:[%s1 + $0xe0] sm:$0xff]
      %v311 = vld [vmem:[%s1 + $0xe8] sm:$0xff]
      %v312 = vld [vmem:[%s1 + $0xf0] sm:$0xff]
      %v313 = vld [vmem:[%s1 + $0xf8] sm:$0xff]
      %v314 = vld [vmem:[%s1 + $0x100] sm:$0xff]
      %v315 = vld [vmem:[%s1 + $0x108] sm:$0xff]
      %v316 = vld [vmem:[%s1 + $0x110] sm:$0xff]
      %v317 = vld [vmem:[%s1 + $0x118] sm:$0xff]
      %v318 = vld [vmem:[%s1 + $0x120] sm:$0xff]
      %v319 = vld [vmem:[%s1 + $0x128] sm:$0xff]
      %v320 = vld [vmem:[%s1 + $0x130] sm:$0xff]
      %v321 = vld [vmem:[%s1 + $0x138] sm:$0xff]
      %v322 = vld [vmem:[%s1 + $0x140] sm:$0xff]
      %v323 = vld [vmem:[%s1 + $0x148] sm:$0xff]
      %v324 = vld [vmem:[%s1 + $0x150] sm:$0xff]
      %v325 = vld [vmem:[%s1 + $0x158] sm:$0xff]
      %v326 = vld [vmem:[%s1 + $0x160] sm:$0xff]
      %v327 = vld [vmem:[%s1 + $0x168] sm:$0xff]
      %v328 = vld [vmem:[%s1 + $0x170] sm:$0xff]
      %v329 = vld [vmem:[%s1 + $0x178] sm:$0xff]
      %v330 = vld [vmem:[%s1 + $0x180] sm:$0xff]
      %v331 = vld [vmem:[%s1 + $0x188] sm:$0xff]
      %v332 = vld [vmem:[%s1 + $0x190] sm:$0xff]
      %v333 = vld [vmem:[%s1 + $0x198] sm:$0xff]
      %v334 = vld [vmem:[%s1 + $0x1a0] sm:$0xff]
      %v335 = vld [vmem:[%s1 + $0x1a8] sm:$0xff]
      %v336 = vld [vmem:[%s1 + $0x1b0] sm:$0xff]
      %v337 = vld [vmem:[%s1 + $0x1b8] sm:$0xff]
      %v338 = vld [vmem:[%s1 + $0x1c0] sm:$0xff]
      %v339 = vld [vmem:[%s1 + $0x1c8] sm:$0xff]
      %v340 = vld [vmem:[%s1 + $0x1d0] sm:$0xff]
      %v341 = vld [vmem:[%s1 + $0x1d8] sm:$0xff]
      %v342 = vld [vmem:[%s1 + $0x1e0] sm:$0xff]
      %v343 = vld [vmem:[%s1 + $0x1e8] sm:$0xff]
      %v344 = vld [vmem:[%s1 + $0x1f0] sm:$0xff]
      %v345 = vld [vmem:[%s1 + $0x1f8] sm:$0xff]
      %v346 = vld [vmem:[%s1 + $0x200] sm:$0xff]
      %v347 = vld [vmem:[%s1 + $0x208] sm:$0xff]
      %v348 = vld [vmem:[%s1 + $0x210] sm:$0xff]
      %v349 = vld [vmem:[%s1 + $0x218] sm:$0xff]
      %v350 = vld [vmem:[%s1 + $0x220] sm:$0xff]
      %v351 = vld [vmem:[%s1 + $0x228] sm:$0xff]
      %v352 = vld [vmem:[%s1 + $0x230] sm:$0xff]
      %v353 = vld [vmem:[%s1 + $0x238] sm:$0xff]
      %v354 = vld [vmem:[%s1 + $0x240] sm:$0xff]
      %v355 = vld [vmem:[%s1 + $0x248] sm:$0xff]
      %v356 = vld [vmem:[%s1 + $0x250] sm:$0xff]
      %v357 = vld [vmem:[%s1 + $0x258] sm:$0xff]
      %v358 = vld [vmem:[%s1 + $0x260] sm:$0xff]
      %v359 = vld [vmem:[%s1 + $0x268] sm:$0xff]
      %v360 = vld [vmem:[%s1 + $0x270] sm:$0xff]
      %v361 = vld [vmem:[%s1 + $0x278] sm:$0xff]
      %v362 = vld [vmem:[%s1 + $0x280] sm:$0xff]
      %v363 = vld [vmem:[%s1 + $0x288] sm:$0xff]
      %v364 = vld [vmem:[%s1 + $0x290] sm:$0xff]
      %v365 = vld [vmem:[%s1 + $0x298] sm:$0xff]
      %v366 = vld [vmem:[%s1 + $0x2a0] sm:$0xff]
      %v367 = vld [vmem:[%s1 + $0x2a8] sm:$0xff]
      %v368 = vld [vmem:[%s1 + $0x2b0] sm:$0xff]
      %v369 = vld [vmem:[%s1 + $0x2b8] sm:$0xff]
      %v370 = vld [vmem:[%s1 + $0x2c0] sm:$0xff]
      %v371 = vld [vmem:[%s1 + $0x2c8] sm:$0xff]
      %v372 = vld [vmem:[%s1 + $0x2d0] sm:$0xff]
      %v373 = vld [vmem:[%s1 + $0x2d8] sm:$0xff]
      %v374 = vld [vmem:[%s1 + $0x2e0] sm:$0xff]
      %v375 = vld [vmem:[%s1 + $0x2e8] sm:$0xff]
      %v376 = vld [vmem:[%s1 + $0x2f0] sm:$0xff]
      %v377 = vld [vmem:[%s1 + $0x2f8] sm:$0xff]
      %v378 = vld [vmem:[%s1 + $0x300] sm:$0xff]
      %v379 = vld [vmem:[%s1 + $0x308] sm:$0xff]
      %v380 = vld [vmem:[%s1 + $0x310] sm:$0xff]
      %v381 = vld [vmem:[%s1 + $0x318] sm:$0xff]
      %v382 = vld [vmem:[%s1 + $0x320] sm:$0xff]
      %v383 = vld [vmem:[%s1 + $0x328] sm:$0xff]
      %v384 = vld [vmem:[%s1 + $0x330] sm:$0xff]
      %v385 = vld [vmem:[%s1 + $0x338] sm:$0xff]
      %v386 = vld [vmem:[%s1 + $0x340] sm:$0xff]
      %v387 = vld [vmem:[%s1 + $0x348] sm:$0xff]
      %v388 = vld [vmem:[%s1 + $0x350] sm:$0xff]
      %v389 = vld [vmem:[%s1 + $0x358] sm:$0xff]
      %v390 = vld [vmem:[%s1 + $0x360] sm:$0xff]
      %v391 = vld [vmem:[%s1 + $0x368] sm:$0xff]
      %v392 = vld [vmem:[%s1 + $0x370] sm:$0xff]
      %v393 = vld [vmem:[%s1 + $0x378] sm:$0xff]
      %v394 = vld [vmem:[%s1 + $0x380] sm:$0xff]
      %v395 = vld [vmem:[%s1 + $0x388] sm:$0xff]
      %v396 = vld [vmem:[%s1 + $0x390] sm:$0xff]
      %v397 = vld [vmem:[%s1 + $0x398] sm:$0xff]
      %v398 = vld [vmem:[%s1 + $0x3a0] sm:$0xff]
      %v399 = vld [vmem:[%s1 + $0x3a8] sm:$0xff]
      %v400 = vld [vmem:[%s1 + $0x3b0] sm:$0xff]
      %v401 = vld [vmem:[%s1 + $0x3b8] sm:$0xff]
      %v402 = vld [vmem:[%s1 + $0x3c0] sm:$0xff]
      %v403 = vld [vmem:[%s1 + $0x3c8] sm:$0xff]
      %v404 = vld [vmem:[%s1 + $0x3d0] sm:$0xff]
      %v405 = vld [vmem:[%s1 + $0x3d8] sm:$0xff]
      %v406 = vld [vmem:[%s1 + $0x3e0] sm:$0xff]
      %v407 = vld [vmem:[%s1 + $0x3e8] sm:$0xff]
      %v408 = vld [vmem:[%s1 + $0x3f0] sm:$0xff]
      %v409 = vld [vmem:[%s1 + $0x3f8] sm:$0xff]
      %410 = vmatpush.msra.mxu0 %v402
      %411 = vmatpush.msra.mxu0 %v394
      %412 = vmatpush.msra.mxu0 %v386
      %413 = vmatpush.msra.mxu0 %v378
      %414 = vmatpush.msra.mxu0 %v370
      %415 = vmatpush.msra.mxu0 %v362
      %416 = vmatpush.msra.mxu0 %v354
      %417 = vmatpush.msra.mxu0 %v346
      %418 = vmatpush.msra.mxu0 %v338
      %419 = vmatpush.msra.mxu0 %v330
      %420 = vmatpush.msra.mxu0 %v322
      %421 = vmatpush.msra.mxu0 %v314
      %422 = vmatpush.msra.mxu0 %v306
      %423 = vmatpush.msra.mxu0 %v298
      %424 = vmatpush.msra.mxu0 %v290
      %425 = vmatpush.msra.mxu0 %v282
      %426 = vmatmul.f32.gmra.mxu0 %v278
      %v427 = vpop.f32.mrf.mxu0
      %v428 = vadd.f32 0.0, %v427
      %429 = vmatmul.f32.gmra.mxu0 %v279
      %v430 = vpop.f32.mrf.mxu0
      %v431 = vadd.f32 0.0, %v430
      %432 = vmatmul.f32.gmra.mxu0 %v280
      %v433 = vpop.f32.mrf.mxu0
      %v434 = vadd.f32 0.0, %v433
      %435 = vmatmul.f32.gmra.mxu0 %v281
      %v436 = vpop.f32.mrf.mxu0
      %v437 = vadd.f32 0.0, %v436
      %438 = vdwg.mxu0
      %439 = vmatpush.msra.mxu0 %v403
      %440 = vmatpush.msra.mxu0 %v395
      %441 = vmatpush.msra.mxu0 %v387
      %442 = vmatpush.msra.mxu0 %v379
      %443 = vmatpush.msra.mxu0 %v371
      %444 = vmatpush.msra.mxu0 %v363
      %445 = vmatpush.msra.mxu0 %v355
      %446 = vmatpush.msra.mxu0 %v347
      %447 = vmatpush.msra.mxu0 %v339
      %448 = vmatpush.msra.mxu0 %v331
      %449 = vmatpush.msra.mxu0 %v323
      %450 = vmatpush.msra.mxu0 %v315
      %451 = vmatpush.msra.mxu0 %v307
      %452 = vmatpush.msra.mxu0 %v299
      %453 = vmatpush.msra.mxu0 %v291
      %454 = vmatpush.msra.mxu0 %v283
      %455 = vmatmul.f32.gmra.mxu0 %v278
      %v456 = vpop.f32.mrf.mxu0
      %v457 = vadd.f32 0.0, %v456
      %458 = vmatmul.f32.gmra.mxu0 %v279
      %v459 = vpop.f32.mrf.mxu0
      %v460 = vadd.f32 0.0, %v459
      %461 = vmatmul.f32.gmra.mxu0 %v280
      %v462 = vpop.f32.mrf.mxu0
      %v463 = vadd.f32 0.0, %v462
      %464 = vmatmul.f32.gmra.mxu0 %v281
      %v465 = vpop.f32.mrf.mxu0
      %v466 = vadd.f32 0.0, %v465
      %467 = vdwg.mxu0
      %468 = vmatpush.msra.mxu0 %v404
      %469 = vmatpush.msra.mxu0 %v396
      %470 = vmatpush.msra.mxu0 %v388
      %471 = vmatpush.msra.mxu0 %v380
      %472 = vmatpush.msra.mxu0 %v372
      %473 = vmatpush.msra.mxu0 %v364
      %474 = vmatpush.msra.mxu0 %v356
      %475 = vmatpush.msra.mxu0 %v348
      %476 = vmatpush.msra.mxu0 %v340
      %477 = vmatpush.msra.mxu0 %v332
      %478 = vmatpush.msra.mxu0 %v324
      %479 = vmatpush.msra.mxu0 %v316
      %480 = vmatpush.msra.mxu0 %v308
      %481 = vmatpush.msra.mxu0 %v300
      %482 = vmatpush.msra.mxu0 %v292
      %483 = vmatpush.msra.mxu0 %v284
      %484 = vmatmul.f32.gmra.mxu0 %v278
      %v485 = vpop.f32.mrf.mxu0
      %v486 = vadd.f32 0.0, %v485
      %487 = vmatmul.f32.gmra.mxu0 %v279
      %v488 = vpop.f32.mrf.mxu0
      %v489 = vadd.f32 0.0, %v488
      %490 = vmatmul.f32.gmra.mxu0 %v280
      %v491 = vpop.f32.mrf.mxu0
      %v492 = vadd.f32 0.0, %v491
      %493 = vmatmul.f32.gmra.mxu0 %v281
      %v494 = vpop.f32.mrf.mxu0
      %v495 = vadd.f32 0.0, %v494
      %496 = vdwg.mxu0
      %497 = vmatpush.msra.mxu0 %v405
      %498 = vmatpush.msra.mxu0 %v397
      %499 = vmatpush.msra.mxu0 %v389
      %500 = vmatpush.msra.mxu0 %v381
      %501 = vmatpush.msra.mxu0 %v373
      %502 = vmatpush.msra.mxu0 %v365
      %503 = vmatpush.msra.mxu0 %v357
      %504 = vmatpush.msra.mxu0 %v349
      %505 = vmatpush.msra.mxu0 %v341
      %506 = vmatpush.msra.mxu0 %v333
      %507 = vmatpush.msra.mxu0 %v325
      %508 = vmatpush.msra.mxu0 %v317
      %509 = vmatpush.msra.mxu0 %v309
      %510 = vmatpush.msra.mxu0 %v301
      %511 = vmatpush.msra.mxu0 %v293
      %512 = vmatpush.msra.mxu0 %v285
      %513 = vmatmul.f32.gmra.mxu0 %v278
      %v514 = vpop.f32.mrf.mxu0
      %v515 = vadd.f32 0.0, %v514
      %516 = vmatmul.f32.gmra.mxu0 %v279
      %v517 = vpop.f32.mrf.mxu0
      %v518 = vadd.f32 0.0, %v517
      %519 = vmatmul.f32.gmra.mxu0 %v280
      %v520 = vpop.f32.mrf.mxu0
      %v521 = vadd.f32 0.0, %v520
      %522 = vmatmul.f32.gmra.mxu0 %v281
      %v523 = vpop.f32.mrf.mxu0
      %v524 = vadd.f32 0.0, %v523
      %525 = vdwg.mxu0
      %526 = vmatpush.msra.mxu0 %v406
      %527 = vmatpush.msra.mxu0 %v398
      %528 = vmatpush.msra.mxu0 %v390
      %529 = vmatpush.msra.mxu0 %v382
      %530 = vmatpush.msra.mxu0 %v374
      %531 = vmatpush.msra.mxu0 %v366
      %532 = vmatpush.msra.mxu0 %v358
      %533 = vmatpush.msra.mxu0 %v350
      %534 = vmatpush.msra.mxu0 %v342
      %535 = vmatpush.msra.mxu0 %v334
      %536 = vmatpush.msra.mxu0 %v326
      %537 = vmatpush.msra.mxu0 %v318
      %538 = vmatpush.msra.mxu0 %v310
      %539 = vmatpush.msra.mxu0 %v302
      %540 = vmatpush.msra.mxu0 %v294
      %541 = vmatpush.msra.mxu0 %v286
      %542 = vmatmul.f32.gmra.mxu0 %v278
      %v543 = vpop.f32.mrf.mxu0
      %v544 = vadd.f32 0.0, %v543
      %545 = vmatmul.f32.gmra.mxu0 %v279
      %v546 = vpop.f32.mrf.mxu0
      %v547 = vadd.f32 0.0, %v546
      %548 = vmatmul.f32.gmra.mxu0 %v280
      %v549 = vpop.f32.mrf.mxu0
      %v550 = vadd.f32 0.0, %v549
      %551 = vmatmul.f32.gmra.mxu0 %v281
      %v552 = vpop.f32.mrf.mxu0
      %v553 = vadd.f32 0.0, %v552
      %554 = vdwg.mxu0
      %555 = vmatpush.msra.mxu0 %v407
      %556 = vmatpush.msra.mxu0 %v399
      %557 = vmatpush.msra.mxu0 %v391
      %558 = vmatpush.msra.mxu0 %v383
      %559 = vmatpush.msra.mxu0 %v375
      %560 = vmatpush.msra.mxu0 %v367
      %561 = vmatpush.msra.mxu0 %v359
      %562 = vmatpush.msra.mxu0 %v351
      %563 = vmatpush.msra.mxu0 %v343
      %564 = vmatpush.msra.mxu0 %v335
      %565 = vmatpush.msra.mxu0 %v327
      %566 = vmatpush.msra.mxu0 %v319
      %567 = vmatpush.msra.mxu0 %v311
      %568 = vmatpush.msra.mxu0 %v303
      %569 = vmatpush.msra.mxu0 %v295
      %570 = vmatpush.msra.mxu0 %v287
      %571 = vmatmul.f32.gmra.mxu0 %v278
      %v572 = vpop.f32.mrf.mxu0
      %v573 = vadd.f32 0.0, %v572
      %574 = vmatmul.f32.gmra.mxu0 %v279
      %v575 = vpop.f32.mrf.mxu0
      %v576 = vadd.f32 0.0, %v575
      %577 = vmatmul.f32.gmra.mxu0 %v280
      %v578 = vpop.f32.mrf.mxu0
      %v579 = vadd.f32 0.0, %v578
      %580 = vmatmul.f32.gmra.mxu0 %v281
      %v581 = vpop.f32.mrf.mxu0
      %v582 = vadd.f32 0.0, %v581
      %583 = vdwg.mxu0
      %584 = vmatpush.msra.mxu0 %v408
      %585 = vmatpush.msra.mxu0 %v400
      %586 = vmatpush.msra.mxu0 %v392
      %587 = vmatpush.msra.mxu0 %v384
      %588 = vmatpush.msra.mxu0 %v376
      %589 = vmatpush.msra.mxu0 %v368
      %590 = vmatpush.msra.mxu0 %v360
      %591 = vmatpush.msra.mxu0 %v352
      %592 = vmatpush.msra.mxu0 %v344
      %593 = vmatpush.msra.mxu0 %v336
      %594 = vmatpush.msra.mxu0 %v328
      %595 = vmatpush.msra.mxu0 %v320
      %596 = vmatpush.msra.mxu0 %v312
      %597 = vmatpush.msra.mxu0 %v304
      %598 = vmatpush.msra.mxu0 %v296
      %599 = vmatpush.msra.mxu0 %v288
      %600 = vmatmul.f32.gmra.mxu0 %v278
      %v601 = vpop.f32.mrf.mxu0
      %v602 = vadd.f32 0.0, %v601
      %603 = vmatmul.f32.gmra.mxu0 %v279
      %v604 = vpop.f32.mrf.mxu0
      %v605 = vadd.f32 0.0, %v604
      %606 = vmatmul.f32.gmra.mxu0 %v280
      %v607 = vpop.f32.mrf.mxu0
      %v608 = vadd.f32 0.0, %v607
      %609 = vmatmul.f32.gmra.mxu0 %v281
      %v610 = vpop.f32.mrf.mxu0
      %v611 = vadd.f32 0.0, %v610
      %612 = vdwg.mxu0
      %613 = vmatpush.msra.mxu0 %v409
      %614 = vmatpush.msra.mxu0 %v401
      %615 = vmatpush.msra.mxu0 %v393
      %616 = vmatpush.msra.mxu0 %v385
      %617 = vmatpush.msra.mxu0 %v377
      %618 = vmatpush.msra.mxu0 %v369
      %619 = vmatpush.msra.mxu0 %v361
      %620 = vmatpush.msra.mxu0 %v353
      %621 = vmatpush.msra.mxu0 %v345
      %622 = vmatpush.msra.mxu0 %v337
      %623 = vmatpush.msra.mxu0 %v329
      %624 = vmatpush.msra.mxu0 %v321
      %625 = vmatpush.msra.mxu0 %v313
      %626 = vmatpush.msra.mxu0 %v305
      %627 = vmatpush.msra.mxu0 %v297
      %628 = vmatpush.msra.mxu0 %v289
      %629 = vmatmul.f32.gmra.mxu0 %v278
      %v630 = vpop.f32.mrf.mxu0
      %v631 = vadd.f32 0.0, %v630
      %632 = vmatmul.f32.gmra.mxu0 %v279
      %v633 = vpop.f32.mrf.mxu0
      %v634 = vadd.f32 0.0, %v633
      %635 = vmatmul.f32.gmra.mxu0 %v280
      %v636 = vpop.f32.mrf.mxu0
      %v637 = vadd.f32 0.0, %v636
      %638 = vmatmul.f32.gmra.mxu0 %v281
      %v639 = vpop.f32.mrf.mxu0
      %v640 = vadd.f32 0.0, %v639
      %641 = vdwg.mxu0
      %v642 = vld [vmem:[%s3] sm:$0xff]
      %v644 = vperm.slane %v642, 0
      %v645 = vperm.slane %v642, 1
      %v646 = vperm.slane %v642, 2
      %v647 = vperm.slane %v642, 3
      %v648 = vperm.slane %v642, 4
      %v649 = vperm.slane %v642, 5
      %v650 = vperm.slane %v642, 6
      %v651 = vperm.slane %v642, 7
      %v660 = vsub.f32 %v644, %v428
      %v661 = vsub.f32 %v645, %v457
      %v662 = vsub.f32 %v646, %v486
      %v663 = vsub.f32 %v647, %v515
      %v664 = vsub.f32 %v648, %v544
      %v665 = vsub.f32 %v649, %v573
      %v666 = vsub.f32 %v650, %v602
      %v667 = vsub.f32 %v651, %v631
      %v668 = vsub.f32 %v644, %v431
      %v669 = vsub.f32 %v645, %v460
      %v670 = vsub.f32 %v646, %v489
      %v671 = vsub.f32 %v647, %v518
      %v672 = vsub.f32 %v648, %v547
      %v673 = vsub.f32 %v649, %v576
      %v674 = vsub.f32 %v650, %v605
      %v675 = vsub.f32 %v651, %v634
      %v676 = vsub.f32 %v644, %v434
      %v677 = vsub.f32 %v645, %v463
      %v678 = vsub.f32 %v646, %v492
      %v679 = vsub.f32 %v647, %v521
      %v680 = vsub.f32 %v648, %v550
      %v681 = vsub.f32 %v649, %v579
      %v682 = vsub.f32 %v650, %v608
      %v683 = vsub.f32 %v651, %v637
      %v684 = vsub.f32 %v644, %v437
      %v685 = vsub.f32 %v645, %v466
      %v686 = vsub.f32 %v646, %v495
      %v687 = vsub.f32 %v647, %v524
      %v688 = vsub.f32 %v648, %v553
      %v689 = vsub.f32 %v649, %v582
      %v690 = vsub.f32 %v650, %v611
      %v691 = vsub.f32 %v651, %v640
      %v692 = vlaneseq
      %v693 = vand.u32 %v692, 127
      %694 = vmin.xlane.f32.xlu0 %v660
      %v695 = vpop.xlane.xlu0 %694
      %696 = vmin.xlane.f32.xlu0 %v668
      %v697 = vpop.xlane.xlu0 %696
      %698 = vmin.xlane.f32.xlu0 %v676
      %v699 = vpop.xlane.xlu0 %698
      %700 = vmin.xlane.f32.xlu0 %v684
      %v701 = vpop.xlane.xlu0 %700
      %vm702 = vcmp.eq.f32.partialorder %v660, %v695
      %vm703 = vcmp.eq.f32.partialorder %v668, %v697
      %vm704 = vcmp.eq.f32.partialorder %v676, %v699
      %vm705 = vcmp.eq.f32.partialorder %v684, %v701
      %v706 = vsel %vm702, %v693, 128
      %v707 = vsel %vm703, %v693, 128
      %v708 = vsel %vm704, %v693, 128
      %v709 = vsel %vm705, %v693, 128
      %v710 = vand.u32 %v706, 65535
      %v711 = vshra.s32 %v706, 16
      %v712 = vcvt.s32.f32 %v710
      %v713 = vcvt.s32.f32 %v711
      %714 = vmin.xlane.f32.xlu0 %v713
      %v715 = vpop.xlane.xlu0 %714
      %vm716 = vcmp.eq.f32.partialorder %v713, %v715
      %v717 = vsel %vm716, %v712, inf
      %718 = vmin.xlane.f32.xlu0 %v717
      %v719 = vpop.xlane.xlu0 %718
      %v720 = vcvt.f32.s32 %v719
      %v721 = vcvt.f32.s32 %v715
      %v722 = vshll.u32 %v721, 16
      %v723 = vadd.s32 %v722, %v720
      %v724 = vand.u32 %v707, 65535
      %v725 = vshra.s32 %v707, 16
      %v726 = vcvt.s32.f32 %v724
      %v727 = vcvt.s32.f32 %v725
      %728 = vmin.xlane.f32.xlu0 %v727
      %v729 = vpop.xlane.xlu0 %728
      %vm730 = vcmp.eq.f32.partialorder %v727, %v729
      %v731 = vsel %vm730, %v726, inf
      %732 = vmin.xlane.f32.xlu0 %v731
      %v733 = vpop.xlane.xlu0 %732
      %v734 = vcvt.f32.s32 %v733
      %v735 = vcvt.f32.s32 %v729
      %v736 = vshll.u32 %v735, 16
      %v737 = vadd.s32 %v736, %v734
      %v738 = vand.u32 %v708, 65535
      %v739 = vshra.s32 %v708, 16
      %v740 = vcvt.s32.f32 %v738
      %v741 = vcvt.s32.f32 %v739
      %742 = vmin.xlane.f32.xlu0 %v741
      %v743 = vpop.xlane.xlu0 %742
      %vm744 = vcmp.eq.f32.partialorder %v741, %v743
      %v745 = vsel %vm744, %v740, inf
      %746 = vmin.xlane.f32.xlu0 %v745
      %v747 = vpop.xlane.xlu0 %746
      %v748 = vcvt.f32.s32 %v747
      %v749 = vcvt.f32.s32 %v743
      %v750 = vshll.u32 %v749, 16
      %v751 = vadd.s32 %v750, %v748
      %v752 = vand.u32 %v709, 65535
      %v753 = vshra.s32 %v709, 16
      %v754 = vcvt.s32.f32 %v752
      %v755 = vcvt.s32.f32 %v753
      %756 = vmin.xlane.f32.xlu0 %v755
      %v757 = vpop.xlane.xlu0 %756
      %vm758 = vcmp.eq.f32.partialorder %v755, %v757
      %v759 = vsel %vm758, %v754, inf
      %760 = vmin.xlane.f32.xlu0 %v759
      %v761 = vpop.xlane.xlu0 %760
      %v762 = vcvt.f32.s32 %v761
      %v763 = vcvt.f32.s32 %v757
      %v764 = vshll.u32 %v763, 16
      %v765 = vadd.s32 %v764, %v762
      %vm766 = vcmp.eq.s32.totalorder %v693, %v723
      %vm767 = vcmp.eq.s32.totalorder %v693, %v737
      %vm768 = vcmp.eq.s32.totalorder %v693, %v751
      %vm769 = vcmp.eq.s32.totalorder %v693, %v765
      %v770 = vsel %vm766, 1, 0
      %v771 = vsel %vm767, 1, 0
      %v772 = vsel %vm768, 1, 0
      %v773 = vsel %vm769, 1, 0
      %v774 = vcvt.s32.f32 %v770
      %v775 = vcvt.s32.f32 %v771
      %v776 = vcvt.s32.f32 %v772
      %v777 = vcvt.s32.f32 %v773
      %778 = vmin.xlane.f32.xlu0 %v661
      %v779 = vpop.xlane.xlu0 %778
      %780 = vmin.xlane.f32.xlu0 %v669
      %v781 = vpop.xlane.xlu0 %780
      %782 = vmin.xlane.f32.xlu0 %v677
      %v783 = vpop.xlane.xlu0 %782
      %784 = vmin.xlane.f32.xlu0 %v685
      %v785 = vpop.xlane.xlu0 %784
      %vm786 = vcmp.eq.f32.partialorder %v661, %v779
      %vm787 = vcmp.eq.f32.partialorder %v669, %v781
      %vm788 = vcmp.eq.f32.partialorder %v677, %v783
      %vm789 = vcmp.eq.f32.partialorder %v685, %v785
      %v790 = vsel %vm786, %v693, 128
      %v791 = vsel %vm787, %v693, 128
      %v792 = vsel %vm788, %v693, 128
      %v793 = vsel %vm789, %v693, 128
      %v794 = vand.u32 %v790, 65535
      %v795 = vshra.s32 %v790, 16
      %v796 = vcvt.s32.f32 %v794
      %v797 = vcvt.s32.f32 %v795
      %798 = vmin.xlane.f32.xlu0 %v797
      %v799 = vpop.xlane.xlu0 %798
      %vm800 = vcmp.eq.f32.partialorder %v797, %v799
      %v801 = vsel %vm800, %v796, inf
      %802 = vmin.xlane.f32.xlu0 %v801
      %v803 = vpop.xlane.xlu0 %802
      %v804 = vcvt.f32.s32 %v803
      %v805 = vcvt.f32.s32 %v799
      %v806 = vshll.u32 %v805, 16
      %v807 = vadd.s32 %v806, %v804
      %v808 = vand.u32 %v791, 65535
      %v809 = vshra.s32 %v791, 16
      %v810 = vcvt.s32.f32 %v808
      %v811 = vcvt.s32.f32 %v809
      %812 = vmin.xlane.f32.xlu0 %v811
      %v813 = vpop.xlane.xlu0 %812
      %vm814 = vcmp.eq.f32.partialorder %v811, %v813
      %v815 = vsel %vm814, %v810, inf
      %816 = vmin.xlane.f32.xlu0 %v815
      %v817 = vpop.xlane.xlu0 %816
      %v818 = vcvt.f32.s32 %v817
      %v819 = vcvt.f32.s32 %v813
      %v820 = vshll.u32 %v819, 16
      %v821 = vadd.s32 %v820, %v818
      %v822 = vand.u32 %v792, 65535
      %v823 = vshra.s32 %v792, 16
      %v824 = vcvt.s32.f32 %v822
      %v825 = vcvt.s32.f32 %v823
      %826 = vmin.xlane.f32.xlu0 %v825
      %v827 = vpop.xlane.xlu0 %826
      %vm828 = vcmp.eq.f32.partialorder %v825, %v827
      %v829 = vsel %vm828, %v824, inf
      %830 = vmin.xlane.f32.xlu0 %v829
      %v831 = vpop.xlane.xlu0 %830
      %v832 = vcvt.f32.s32 %v831
      %v833 = vcvt.f32.s32 %v827
      %v834 = vshll.u32 %v833, 16
      %v835 = vadd.s32 %v834, %v832
      %v836 = vand.u32 %v793, 65535
      %v837 = vshra.s32 %v793, 16
      %v838 = vcvt.s32.f32 %v836
      %v839 = vcvt.s32.f32 %v837
      %840 = vmin.xlane.f32.xlu0 %v839
      %v841 = vpop.xlane.xlu0 %840
      %vm842 = vcmp.eq.f32.partialorder %v839, %v841
      %v843 = vsel %vm842, %v838, inf
      %844 = vmin.xlane.f32.xlu0 %v843
      %v845 = vpop.xlane.xlu0 %844
      %v846 = vcvt.f32.s32 %v845
      %v847 = vcvt.f32.s32 %v841
      %v848 = vshll.u32 %v847, 16
      %v849 = vadd.s32 %v848, %v846
      %vm850 = vcmp.eq.s32.totalorder %v693, %v807
      %vm851 = vcmp.eq.s32.totalorder %v693, %v821
      %vm852 = vcmp.eq.s32.totalorder %v693, %v835
      %vm853 = vcmp.eq.s32.totalorder %v693, %v849
      %v854 = vsel %vm850, 1, 0
      %v855 = vsel %vm851, 1, 0
      %v856 = vsel %vm852, 1, 0
      %v857 = vsel %vm853, 1, 0
      %v858 = vcvt.s32.f32 %v854
      %v859 = vcvt.s32.f32 %v855
      %v860 = vcvt.s32.f32 %v856
      %v861 = vcvt.s32.f32 %v857
      %862 = vmin.xlane.f32.xlu0 %v662
      %v863 = vpop.xlane.xlu0 %862
      %864 = vmin.xlane.f32.xlu0 %v670
      %v865 = vpop.xlane.xlu0 %864
      %866 = vmin.xlane.f32.xlu0 %v678
      %v867 = vpop.xlane.xlu0 %866
      %868 = vmin.xlane.f32.xlu0 %v686
      %v869 = vpop.xlane.xlu0 %868
      %vm870 = vcmp.eq.f32.partialorder %v662, %v863
      %vm871 = vcmp.eq.f32.partialorder %v670, %v865
      %vm872 = vcmp.eq.f32.partialorder %v678, %v867
      %vm873 = vcmp.eq.f32.partialorder %v686, %v869
      %v874 = vsel %vm870, %v693, 128
      %v875 = vsel %vm871, %v693, 128
      %v876 = vsel %vm872, %v693, 128
      %v877 = vsel %vm873, %v693, 128
      %v878 = vand.u32 %v874, 65535
      %v879 = vshra.s32 %v874, 16
      %v880 = vcvt.s32.f32 %v878
      %v881 = vcvt.s32.f32 %v879
      %882 = vmin.xlane.f32.xlu0 %v881
      %v883 = vpop.xlane.xlu0 %882
      %vm884 = vcmp.eq.f32.partialorder %v881, %v883
      %v885 = vsel %vm884, %v880, inf
      %886 = vmin.xlane.f32.xlu0 %v885
      %v887 = vpop.xlane.xlu0 %886
      %v888 = vcvt.f32.s32 %v887
      %v889 = vcvt.f32.s32 %v883
      %v890 = vshll.u32 %v889, 16
      %v891 = vadd.s32 %v890, %v888
      %v892 = vand.u32 %v875, 65535
      %v893 = vshra.s32 %v875, 16
      %v894 = vcvt.s32.f32 %v892
      %v895 = vcvt.s32.f32 %v893
      %896 = vmin.xlane.f32.xlu0 %v895
      %v897 = vpop.xlane.xlu0 %896
      %vm898 = vcmp.eq.f32.partialorder %v895, %v897
      %v899 = vsel %vm898, %v894, inf
      %900 = vmin.xlane.f32.xlu0 %v899
      %v901 = vpop.xlane.xlu0 %900
      %v902 = vcvt.f32.s32 %v901
      %v903 = vcvt.f32.s32 %v897
      %v904 = vshll.u32 %v903, 16
      %v905 = vadd.s32 %v904, %v902
      %v906 = vand.u32 %v876, 65535
      %v907 = vshra.s32 %v876, 16
      %v908 = vcvt.s32.f32 %v906
      %v909 = vcvt.s32.f32 %v907
      %910 = vmin.xlane.f32.xlu0 %v909
      %v911 = vpop.xlane.xlu0 %910
      %vm912 = vcmp.eq.f32.partialorder %v909, %v911
      %v913 = vsel %vm912, %v908, inf
      %914 = vmin.xlane.f32.xlu0 %v913
      %v915 = vpop.xlane.xlu0 %914
      %v916 = vcvt.f32.s32 %v915
      %v917 = vcvt.f32.s32 %v911
      %v918 = vshll.u32 %v917, 16
      %v919 = vadd.s32 %v918, %v916
      %v920 = vand.u32 %v877, 65535
      %v921 = vshra.s32 %v877, 16
      %v922 = vcvt.s32.f32 %v920
      %v923 = vcvt.s32.f32 %v921
      %924 = vmin.xlane.f32.xlu0 %v923
      %v925 = vpop.xlane.xlu0 %924
      %vm926 = vcmp.eq.f32.partialorder %v923, %v925
      %v927 = vsel %vm926, %v922, inf
      %928 = vmin.xlane.f32.xlu0 %v927
      %v929 = vpop.xlane.xlu0 %928
      %v930 = vcvt.f32.s32 %v929
      %v931 = vcvt.f32.s32 %v925
      %v932 = vshll.u32 %v931, 16
      %v933 = vadd.s32 %v932, %v930
      %vm934 = vcmp.eq.s32.totalorder %v693, %v891
      %vm935 = vcmp.eq.s32.totalorder %v693, %v905
      %vm936 = vcmp.eq.s32.totalorder %v693, %v919
      %vm937 = vcmp.eq.s32.totalorder %v693, %v933
      %v938 = vsel %vm934, 1, 0
      %v939 = vsel %vm935, 1, 0
      %v940 = vsel %vm936, 1, 0
      %v941 = vsel %vm937, 1, 0
      %v942 = vcvt.s32.f32 %v938
      %v943 = vcvt.s32.f32 %v939
      %v944 = vcvt.s32.f32 %v940
      %v945 = vcvt.s32.f32 %v941
      %946 = vmin.xlane.f32.xlu0 %v663
      %v947 = vpop.xlane.xlu0 %946
      %948 = vmin.xlane.f32.xlu0 %v671
      %v949 = vpop.xlane.xlu0 %948
      %950 = vmin.xlane.f32.xlu0 %v679
      %v951 = vpop.xlane.xlu0 %950
      %952 = vmin.xlane.f32.xlu0 %v687
      %v953 = vpop.xlane.xlu0 %952
      %vm954 = vcmp.eq.f32.partialorder %v663, %v947
      %vm955 = vcmp.eq.f32.partialorder %v671, %v949
      %vm956 = vcmp.eq.f32.partialorder %v679, %v951
      %vm957 = vcmp.eq.f32.partialorder %v687, %v953
      %v958 = vsel %vm954, %v693, 128
      %v959 = vsel %vm955, %v693, 128
      %v960 = vsel %vm956, %v693, 128
      %v961 = vsel %vm957, %v693, 128
      %v962 = vand.u32 %v958, 65535
      %v963 = vshra.s32 %v958, 16
      %v964 = vcvt.s32.f32 %v962
      %v965 = vcvt.s32.f32 %v963
      %966 = vmin.xlane.f32.xlu0 %v965
      %v967 = vpop.xlane.xlu0 %966
      %vm968 = vcmp.eq.f32.partialorder %v965, %v967
      %v969 = vsel %vm968, %v964, inf
      %970 = vmin.xlane.f32.xlu0 %v969
      %v971 = vpop.xlane.xlu0 %970
      %v972 = vcvt.f32.s32 %v971
      %v973 = vcvt.f32.s32 %v967
      %v974 = vshll.u32 %v973, 16
      %v975 = vadd.s32 %v974, %v972
      %v976 = vand.u32 %v959, 65535
      %v977 = vshra.s32 %v959, 16
      %v978 = vcvt.s32.f32 %v976
      %v979 = vcvt.s32.f32 %v977
      %980 = vmin.xlane.f32.xlu0 %v979
      %v981 = vpop.xlane.xlu0 %980
      %vm982 = vcmp.eq.f32.partialorder %v979, %v981
      %v983 = vsel %vm982, %v978, inf
      %984 = vmin.xlane.f32.xlu0 %v983
      %v985 = vpop.xlane.xlu0 %984
      %v986 = vcvt.f32.s32 %v985
      %v987 = vcvt.f32.s32 %v981
      %v988 = vshll.u32 %v987, 16
      %v989 = vadd.s32 %v988, %v986
      %v990 = vand.u32 %v960, 65535
      %v991 = vshra.s32 %v960, 16
      %v992 = vcvt.s32.f32 %v990
      %v993 = vcvt.s32.f32 %v991
      %994 = vmin.xlane.f32.xlu0 %v993
      %v995 = vpop.xlane.xlu0 %994
      %vm996 = vcmp.eq.f32.partialorder %v993, %v995
      %v997 = vsel %vm996, %v992, inf
      %998 = vmin.xlane.f32.xlu0 %v997
      %v999 = vpop.xlane.xlu0 %998
      %v1000 = vcvt.f32.s32 %v999
      %v1001 = vcvt.f32.s32 %v995
      %v1002 = vshll.u32 %v1001, 16
      %v1003 = vadd.s32 %v1002, %v1000
      %v1004 = vand.u32 %v961, 65535
      %v1005 = vshra.s32 %v961, 16
      %v1006 = vcvt.s32.f32 %v1004
      %v1007 = vcvt.s32.f32 %v1005
      %1008 = vmin.xlane.f32.xlu0 %v1007
      %v1009 = vpop.xlane.xlu0 %1008
      %vm1010 = vcmp.eq.f32.partialorder %v1007, %v1009
      %v1011 = vsel %vm1010, %v1006, inf
      %1012 = vmin.xlane.f32.xlu0 %v1011
      %v1013 = vpop.xlane.xlu0 %1012
      %v1014 = vcvt.f32.s32 %v1013
      %v1015 = vcvt.f32.s32 %v1009
      %v1016 = vshll.u32 %v1015, 16
      %v1017 = vadd.s32 %v1016, %v1014
      %vm1018 = vcmp.eq.s32.totalorder %v693, %v975
      %vm1019 = vcmp.eq.s32.totalorder %v693, %v989
      %vm1020 = vcmp.eq.s32.totalorder %v693, %v1003
      %vm1021 = vcmp.eq.s32.totalorder %v693, %v1017
      %v1022 = vsel %vm1018, 1, 0
      %v1023 = vsel %vm1019, 1, 0
      %v1024 = vsel %vm1020, 1, 0
      %v1025 = vsel %vm1021, 1, 0
      %v1026 = vcvt.s32.f32 %v1022
      %v1027 = vcvt.s32.f32 %v1023
      %v1028 = vcvt.s32.f32 %v1024
      %v1029 = vcvt.s32.f32 %v1025
      %1030 = vmin.xlane.f32.xlu0 %v664
      %v1031 = vpop.xlane.xlu0 %1030
      %1032 = vmin.xlane.f32.xlu0 %v672
      %v1033 = vpop.xlane.xlu0 %1032
      %1034 = vmin.xlane.f32.xlu0 %v680
      %v1035 = vpop.xlane.xlu0 %1034
      %1036 = vmin.xlane.f32.xlu0 %v688
      %v1037 = vpop.xlane.xlu0 %1036
      %vm1038 = vcmp.eq.f32.partialorder %v664, %v1031
      %vm1039 = vcmp.eq.f32.partialorder %v672, %v1033
      %vm1040 = vcmp.eq.f32.partialorder %v680, %v1035
      %vm1041 = vcmp.eq.f32.partialorder %v688, %v1037
      %v1042 = vsel %vm1038, %v693, 128
      %v1043 = vsel %vm1039, %v693, 128
      %v1044 = vsel %vm1040, %v693, 128
      %v1045 = vsel %vm1041, %v693, 128
      %v1046 = vand.u32 %v1042, 65535
      %v1047 = vshra.s32 %v1042, 16
      %v1048 = vcvt.s32.f32 %v1046
      %v1049 = vcvt.s32.f32 %v1047
      %1050 = vmin.xlane.f32.xlu0 %v1049
      %v1051 = vpop.xlane.xlu0 %1050
      %vm1052 = vcmp.eq.f32.partialorder %v1049, %v1051
      %v1053 = vsel %vm1052, %v1048, inf
      %1054 = vmin.xlane.f32.xlu0 %v1053
      %v1055 = vpop.xlane.xlu0 %1054
      %v1056 = vcvt.f32.s32 %v1055
      %v1057 = vcvt.f32.s32 %v1051
      %v1058 = vshll.u32 %v1057, 16
      %v1059 = vadd.s32 %v1058, %v1056
      %v1060 = vand.u32 %v1043, 65535
      %v1061 = vshra.s32 %v1043, 16
      %v1062 = vcvt.s32.f32 %v1060
      %v1063 = vcvt.s32.f32 %v1061
      %1064 = vmin.xlane.f32.xlu0 %v1063
      %v1065 = vpop.xlane.xlu0 %1064
      %vm1066 = vcmp.eq.f32.partialorder %v1063, %v1065
      %v1067 = vsel %vm1066, %v1062, inf
      %1068 = vmin.xlane.f32.xlu0 %v1067
      %v1069 = vpop.xlane.xlu0 %1068
      %v1070 = vcvt.f32.s32 %v1069
      %v1071 = vcvt.f32.s32 %v1065
      %v1072 = vshll.u32 %v1071, 16
      %v1073 = vadd.s32 %v1072, %v1070
      %v1074 = vand.u32 %v1044, 65535
      %v1075 = vshra.s32 %v1044, 16
      %v1076 = vcvt.s32.f32 %v1074
      %v1077 = vcvt.s32.f32 %v1075
      %1078 = vmin.xlane.f32.xlu0 %v1077
      %v1079 = vpop.xlane.xlu0 %1078
      %vm1080 = vcmp.eq.f32.partialorder %v1077, %v1079
      %v1081 = vsel %vm1080, %v1076, inf
      %1082 = vmin.xlane.f32.xlu0 %v1081
      %v1083 = vpop.xlane.xlu0 %1082
      %v1084 = vcvt.f32.s32 %v1083
      %v1085 = vcvt.f32.s32 %v1079
      %v1086 = vshll.u32 %v1085, 16
      %v1087 = vadd.s32 %v1086, %v1084
      %v1088 = vand.u32 %v1045, 65535
      %v1089 = vshra.s32 %v1045, 16
      %v1090 = vcvt.s32.f32 %v1088
      %v1091 = vcvt.s32.f32 %v1089
      %1092 = vmin.xlane.f32.xlu0 %v1091
      %v1093 = vpop.xlane.xlu0 %1092
      %vm1094 = vcmp.eq.f32.partialorder %v1091, %v1093
      %v1095 = vsel %vm1094, %v1090, inf
      %1096 = vmin.xlane.f32.xlu0 %v1095
      %v1097 = vpop.xlane.xlu0 %1096
      %v1098 = vcvt.f32.s32 %v1097
      %v1099 = vcvt.f32.s32 %v1093
      %v1100 = vshll.u32 %v1099, 16
      %v1101 = vadd.s32 %v1100, %v1098
      %vm1102 = vcmp.eq.s32.totalorder %v693, %v1059
      %vm1103 = vcmp.eq.s32.totalorder %v693, %v1073
      %vm1104 = vcmp.eq.s32.totalorder %v693, %v1087
      %vm1105 = vcmp.eq.s32.totalorder %v693, %v1101
      %v1106 = vsel %vm1102, 1, 0
      %v1107 = vsel %vm1103, 1, 0
      %v1108 = vsel %vm1104, 1, 0
      %v1109 = vsel %vm1105, 1, 0
      %v1110 = vcvt.s32.f32 %v1106
      %v1111 = vcvt.s32.f32 %v1107
      %v1112 = vcvt.s32.f32 %v1108
      %v1113 = vcvt.s32.f32 %v1109
      %1114 = vmin.xlane.f32.xlu0 %v665
      %v1115 = vpop.xlane.xlu0 %1114
      %1116 = vmin.xlane.f32.xlu0 %v673
      %v1117 = vpop.xlane.xlu0 %1116
      %1118 = vmin.xlane.f32.xlu0 %v681
      %v1119 = vpop.xlane.xlu0 %1118
      %1120 = vmin.xlane.f32.xlu0 %v689
      %v1121 = vpop.xlane.xlu0 %1120
      %vm1122 = vcmp.eq.f32.partialorder %v665, %v1115
      %vm1123 = vcmp.eq.f32.partialorder %v673, %v1117
      %vm1124 = vcmp.eq.f32.partialorder %v681, %v1119
      %vm1125 = vcmp.eq.f32.partialorder %v689, %v1121
      %v1126 = vsel %vm1122, %v693, 128
      %v1127 = vsel %vm1123, %v693, 128
      %v1128 = vsel %vm1124, %v693, 128
      %v1129 = vsel %vm1125, %v693, 128
      %v1130 = vand.u32 %v1126, 65535
      %v1131 = vshra.s32 %v1126, 16
      %v1132 = vcvt.s32.f32 %v1130
      %v1133 = vcvt.s32.f32 %v1131
      %1134 = vmin.xlane.f32.xlu0 %v1133
      %v1135 = vpop.xlane.xlu0 %1134
      %vm1136 = vcmp.eq.f32.partialorder %v1133, %v1135
      %v1137 = vsel %vm1136, %v1132, inf
      %1138 = vmin.xlane.f32.xlu0 %v1137
      %v1139 = vpop.xlane.xlu0 %1138
      %v1140 = vcvt.f32.s32 %v1139
      %v1141 = vcvt.f32.s32 %v1135
      %v1142 = vshll.u32 %v1141, 16
      %v1143 = vadd.s32 %v1142, %v1140
      %v1144 = vand.u32 %v1127, 65535
      %v1145 = vshra.s32 %v1127, 16
      %v1146 = vcvt.s32.f32 %v1144
      %v1147 = vcvt.s32.f32 %v1145
      %1148 = vmin.xlane.f32.xlu0 %v1147
      %v1149 = vpop.xlane.xlu0 %1148
      %vm1150 = vcmp.eq.f32.partialorder %v1147, %v1149
      %v1151 = vsel %vm1150, %v1146, inf
      %1152 = vmin.xlane.f32.xlu0 %v1151
      %v1153 = vpop.xlane.xlu0 %1152
      %v1154 = vcvt.f32.s32 %v1153
      %v1155 = vcvt.f32.s32 %v1149
      %v1156 = vshll.u32 %v1155, 16
      %v1157 = vadd.s32 %v1156, %v1154
      %v1158 = vand.u32 %v1128, 65535
      %v1159 = vshra.s32 %v1128, 16
      %v1160 = vcvt.s32.f32 %v1158
      %v1161 = vcvt.s32.f32 %v1159
      %1162 = vmin.xlane.f32.xlu0 %v1161
      %v1163 = vpop.xlane.xlu0 %1162
      %vm1164 = vcmp.eq.f32.partialorder %v1161, %v1163
      %v1165 = vsel %vm1164, %v1160, inf
      %1166 = vmin.xlane.f32.xlu0 %v1165
      %v1167 = vpop.xlane.xlu0 %1166
      %v1168 = vcvt.f32.s32 %v1167
      %v1169 = vcvt.f32.s32 %v1163
      %v1170 = vshll.u32 %v1169, 16
      %v1171 = vadd.s32 %v1170, %v1168
      %v1172 = vand.u32 %v1129, 65535
      %v1173 = vshra.s32 %v1129, 16
      %v1174 = vcvt.s32.f32 %v1172
      %v1175 = vcvt.s32.f32 %v1173
      %1176 = vmin.xlane.f32.xlu0 %v1175
      %v1177 = vpop.xlane.xlu0 %1176
      %vm1178 = vcmp.eq.f32.partialorder %v1175, %v1177
      %v1179 = vsel %vm1178, %v1174, inf
      %1180 = vmin.xlane.f32.xlu0 %v1179
      %v1181 = vpop.xlane.xlu0 %1180
      %v1182 = vcvt.f32.s32 %v1181
      %v1183 = vcvt.f32.s32 %v1177
      %v1184 = vshll.u32 %v1183, 16
      %v1185 = vadd.s32 %v1184, %v1182
      %vm1186 = vcmp.eq.s32.totalorder %v693, %v1143
      %vm1187 = vcmp.eq.s32.totalorder %v693, %v1157
      %vm1188 = vcmp.eq.s32.totalorder %v693, %v1171
      %vm1189 = vcmp.eq.s32.totalorder %v693, %v1185
      %v1190 = vsel %vm1186, 1, 0
      %v1191 = vsel %vm1187, 1, 0
      %v1192 = vsel %vm1188, 1, 0
      %v1193 = vsel %vm1189, 1, 0
      %v1194 = vcvt.s32.f32 %v1190
      %v1195 = vcvt.s32.f32 %v1191
      %v1196 = vcvt.s32.f32 %v1192
      %v1197 = vcvt.s32.f32 %v1193
      %1198 = vmin.xlane.f32.xlu0 %v666
      %v1199 = vpop.xlane.xlu0 %1198
      %1200 = vmin.xlane.f32.xlu0 %v674
      %v1201 = vpop.xlane.xlu0 %1200
      %1202 = vmin.xlane.f32.xlu0 %v682
      %v1203 = vpop.xlane.xlu0 %1202
      %1204 = vmin.xlane.f32.xlu0 %v690
      %v1205 = vpop.xlane.xlu0 %1204
      %vm1206 = vcmp.eq.f32.partialorder %v666, %v1199
      %vm1207 = vcmp.eq.f32.partialorder %v674, %v1201
      %vm1208 = vcmp.eq.f32.partialorder %v682, %v1203
      %vm1209 = vcmp.eq.f32.partialorder %v690, %v1205
      %v1210 = vsel %vm1206, %v693, 128
      %v1211 = vsel %vm1207, %v693, 128
      %v1212 = vsel %vm1208, %v693, 128
      %v1213 = vsel %vm1209, %v693, 128
      %v1214 = vand.u32 %v1210, 65535
      %v1215 = vshra.s32 %v1210, 16
      %v1216 = vcvt.s32.f32 %v1214
      %v1217 = vcvt.s32.f32 %v1215
      %1218 = vmin.xlane.f32.xlu0 %v1217
      %v1219 = vpop.xlane.xlu0 %1218
      %vm1220 = vcmp.eq.f32.partialorder %v1217, %v1219
      %v1221 = vsel %vm1220, %v1216, inf
      %1222 = vmin.xlane.f32.xlu0 %v1221
      %v1223 = vpop.xlane.xlu0 %1222
      %v1224 = vcvt.f32.s32 %v1223
      %v1225 = vcvt.f32.s32 %v1219
      %v1226 = vshll.u32 %v1225, 16
      %v1227 = vadd.s32 %v1226, %v1224
      %v1228 = vand.u32 %v1211, 65535
      %v1229 = vshra.s32 %v1211, 16
      %v1230 = vcvt.s32.f32 %v1228
      %v1231 = vcvt.s32.f32 %v1229
      %1232 = vmin.xlane.f32.xlu0 %v1231
      %v1233 = vpop.xlane.xlu0 %1232
      %vm1234 = vcmp.eq.f32.partialorder %v1231, %v1233
      %v1235 = vsel %vm1234, %v1230, inf
      %1236 = vmin.xlane.f32.xlu0 %v1235
      %v1237 = vpop.xlane.xlu0 %1236
      %v1238 = vcvt.f32.s32 %v1237
      %v1239 = vcvt.f32.s32 %v1233
      %v1240 = vshll.u32 %v1239, 16
      %v1241 = vadd.s32 %v1240, %v1238
      %v1242 = vand.u32 %v1212, 65535
      %v1243 = vshra.s32 %v1212, 16
      %v1244 = vcvt.s32.f32 %v1242
      %v1245 = vcvt.s32.f32 %v1243
      %1246 = vmin.xlane.f32.xlu0 %v1245
      %v1247 = vpop.xlane.xlu0 %1246
      %vm1248 = vcmp.eq.f32.partialorder %v1245, %v1247
      %v1249 = vsel %vm1248, %v1244, inf
      %1250 = vmin.xlane.f32.xlu0 %v1249
      %v1251 = vpop.xlane.xlu0 %1250
      %v1252 = vcvt.f32.s32 %v1251
      %v1253 = vcvt.f32.s32 %v1247
      %v1254 = vshll.u32 %v1253, 16
      %v1255 = vadd.s32 %v1254, %v1252
      %v1256 = vand.u32 %v1213, 65535
      %v1257 = vshra.s32 %v1213, 16
      %v1258 = vcvt.s32.f32 %v1256
      %v1259 = vcvt.s32.f32 %v1257
      %1260 = vmin.xlane.f32.xlu0 %v1259
      %v1261 = vpop.xlane.xlu0 %1260
      %vm1262 = vcmp.eq.f32.partialorder %v1259, %v1261
      %v1263 = vsel %vm1262, %v1258, inf
      %1264 = vmin.xlane.f32.xlu0 %v1263
      %v1265 = vpop.xlane.xlu0 %1264
      %v1266 = vcvt.f32.s32 %v1265
      %v1267 = vcvt.f32.s32 %v1261
      %v1268 = vshll.u32 %v1267, 16
      %v1269 = vadd.s32 %v1268, %v1266
      %vm1270 = vcmp.eq.s32.totalorder %v693, %v1227
      %vm1271 = vcmp.eq.s32.totalorder %v693, %v1241
      %vm1272 = vcmp.eq.s32.totalorder %v693, %v1255
      %vm1273 = vcmp.eq.s32.totalorder %v693, %v1269
      %v1274 = vsel %vm1270, 1, 0
      %v1275 = vsel %vm1271, 1, 0
      %v1276 = vsel %vm1272, 1, 0
      %v1277 = vsel %vm1273, 1, 0
      %v1278 = vcvt.s32.f32 %v1274
      %v1279 = vcvt.s32.f32 %v1275
      %v1280 = vcvt.s32.f32 %v1276
      %v1281 = vcvt.s32.f32 %v1277
      %1282 = vmin.xlane.f32.xlu0 %v667
      %v1283 = vpop.xlane.xlu0 %1282
      %1284 = vmin.xlane.f32.xlu0 %v675
      %v1285 = vpop.xlane.xlu0 %1284
      %1286 = vmin.xlane.f32.xlu0 %v683
      %v1287 = vpop.xlane.xlu0 %1286
      %1288 = vmin.xlane.f32.xlu0 %v691
      %v1289 = vpop.xlane.xlu0 %1288
      %vm1290 = vcmp.eq.f32.partialorder %v667, %v1283
      %vm1291 = vcmp.eq.f32.partialorder %v675, %v1285
      %vm1292 = vcmp.eq.f32.partialorder %v683, %v1287
      %vm1293 = vcmp.eq.f32.partialorder %v691, %v1289
      %v1294 = vsel %vm1290, %v693, 128
      %v1295 = vsel %vm1291, %v693, 128
      %v1296 = vsel %vm1292, %v693, 128
      %v1297 = vsel %vm1293, %v693, 128
      %v1298 = vand.u32 %v1294, 65535
      %v1299 = vshra.s32 %v1294, 16
      %v1300 = vcvt.s32.f32 %v1298
      %v1301 = vcvt.s32.f32 %v1299
      %1302 = vmin.xlane.f32.xlu0 %v1301
      %v1303 = vpop.xlane.xlu0 %1302
      %vm1304 = vcmp.eq.f32.partialorder %v1301, %v1303
      %v1305 = vsel %vm1304, %v1300, inf
      %1306 = vmin.xlane.f32.xlu0 %v1305
      %v1307 = vpop.xlane.xlu0 %1306
      %v1308 = vcvt.f32.s32 %v1307
      %v1309 = vcvt.f32.s32 %v1303
      %v1310 = vshll.u32 %v1309, 16
      %v1311 = vadd.s32 %v1310, %v1308
      %v1312 = vand.u32 %v1295, 65535
      %v1313 = vshra.s32 %v1295, 16
      %v1314 = vcvt.s32.f32 %v1312
      %v1315 = vcvt.s32.f32 %v1313
      %1316 = vmin.xlane.f32.xlu0 %v1315
      %v1317 = vpop.xlane.xlu0 %1316
      %vm1318 = vcmp.eq.f32.partialorder %v1315, %v1317
      %v1319 = vsel %vm1318, %v1314, inf
      %1320 = vmin.xlane.f32.xlu0 %v1319
      %v1321 = vpop.xlane.xlu0 %1320
      %v1322 = vcvt.f32.s32 %v1321
      %v1323 = vcvt.f32.s32 %v1317
      %v1324 = vshll.u32 %v1323, 16
      %v1325 = vadd.s32 %v1324, %v1322
      %v1326 = vand.u32 %v1296, 65535
      %v1327 = vshra.s32 %v1296, 16
      %v1328 = vcvt.s32.f32 %v1326
      %v1329 = vcvt.s32.f32 %v1327
      %1330 = vmin.xlane.f32.xlu0 %v1329
      %v1331 = vpop.xlane.xlu0 %1330
      %vm1332 = vcmp.eq.f32.partialorder %v1329, %v1331
      %v1333 = vsel %vm1332, %v1328, inf
      %1334 = vmin.xlane.f32.xlu0 %v1333
      %v1335 = vpop.xlane.xlu0 %1334
      %v1336 = vcvt.f32.s32 %v1335
      %v1337 = vcvt.f32.s32 %v1331
      %v1338 = vshll.u32 %v1337, 16
      %v1339 = vadd.s32 %v1338, %v1336
      %v1340 = vand.u32 %v1297, 65535
      %v1341 = vshra.s32 %v1297, 16
      %v1342 = vcvt.s32.f32 %v1340
      %v1343 = vcvt.s32.f32 %v1341
      %1344 = vmin.xlane.f32.xlu0 %v1343
      %v1345 = vpop.xlane.xlu0 %1344
      %vm1346 = vcmp.eq.f32.partialorder %v1343, %v1345
      %v1347 = vsel %vm1346, %v1342, inf
      %1348 = vmin.xlane.f32.xlu0 %v1347
      %v1349 = vpop.xlane.xlu0 %1348
      %v1350 = vcvt.f32.s32 %v1349
      %v1351 = vcvt.f32.s32 %v1345
      %v1352 = vshll.u32 %v1351, 16
      %v1353 = vadd.s32 %v1352, %v1350
      %vm1354 = vcmp.eq.s32.totalorder %v693, %v1311
      %vm1355 = vcmp.eq.s32.totalorder %v693, %v1325
      %vm1356 = vcmp.eq.s32.totalorder %v693, %v1339
      %vm1357 = vcmp.eq.s32.totalorder %v693, %v1353
      %v1358 = vsel %vm1354, 1, 0
      %v1359 = vsel %vm1355, 1, 0
      %v1360 = vsel %vm1356, 1, 0
      %v1361 = vsel %vm1357, 1, 0
      %v1362 = vcvt.s32.f32 %v1358
      %v1363 = vcvt.s32.f32 %v1359
      %v1364 = vcvt.s32.f32 %v1360
      %v1365 = vcvt.s32.f32 %v1361
      %vm1366 = vcmask 7168
      %v1367 = vsel %vm1366, %v723, %v807
      %v1368 = vsel %vm1366, %v737, %v821
      %v1369 = vsel %vm1366, %v751, %v835
      %v1370 = vsel %vm1366, %v765, %v849
      %vm1371 = vcmask 15360
      %v1372 = vsel %vm1371, %v1367, %v891
      %v1373 = vsel %vm1371, %v1368, %v905
      %v1374 = vsel %vm1371, %v1369, %v919
      %v1375 = vsel %vm1371, %v1370, %v933
      %vm1376 = vcmask 23552
      %v1377 = vsel %vm1376, %v1372, %v975
      %v1378 = vsel %vm1376, %v1373, %v989
      %v1379 = vsel %vm1376, %v1374, %v1003
      %v1380 = vsel %vm1376, %v1375, %v1017
      %vm1381 = vcmask 31744
      %v1382 = vsel %vm1381, %v1377, %v1059
      %v1383 = vsel %vm1381, %v1378, %v1073
      %v1384 = vsel %vm1381, %v1379, %v1087
      %v1385 = vsel %vm1381, %v1380, %v1101
      %vm1386 = vcmask 39936
      %v1387 = vsel %vm1386, %v1382, %v1143
      %v1388 = vsel %vm1386, %v1383, %v1157
      %v1389 = vsel %vm1386, %v1384, %v1171
      %v1390 = vsel %vm1386, %v1385, %v1185
      %vm1391 = vcmask 48128
      %v1392 = vsel %vm1391, %v1387, %v1227
      %v1393 = vsel %vm1391, %v1388, %v1241
      %v1394 = vsel %vm1391, %v1389, %v1255
      %v1395 = vsel %vm1391, %v1390, %v1269
      %vm1396 = vcmask 56320
      %v1397 = vsel %vm1396, %v1392, %v1311
      %v1398 = vsel %vm1396, %v1393, %v1325
      %v1399 = vsel %vm1396, %v1394, %v1339
      %v1400 = vsel %vm1396, %v1395, %v1353
      %vm1401 = vcmask 64512
      %1402 = vst.msk [vmem:[%s273] sm:$0xff] %vm1401, %v1397
      %1403 = vst.msk [vmem:[%s273 + $0x8] sm:$0xff] %vm1401, %v1398
      %1404 = vst.msk [vmem:[%s273 + $0x10] sm:$0xff] %vm1401, %v1399
      %1405 = vst.msk [vmem:[%s273 + $0x18] sm:$0xff] %vm1401, %v1400
      %v1406 = vld [vmem:[%s2] sm:$0xff]
      %v1407 = vld [vmem:[%s2 + $0x8] sm:$0xff]
      %v1408 = vld [vmem:[%s2 + $0x10] sm:$0xff]
      %v1409 = vld [vmem:[%s2 + $0x18] sm:$0xff]
      %v1410 = vld [vmem:[%s2 + $0x20] sm:$0xff]
      %v1411 = vld [vmem:[%s2 + $0x28] sm:$0xff]
      %v1412 = vld [vmem:[%s2 + $0x30] sm:$0xff]
      %v1413 = vld [vmem:[%s2 + $0x38] sm:$0xff]
      %v1414 = vld [vmem:[%s2 + $0x40] sm:$0xff]
      %v1415 = vld [vmem:[%s2 + $0x48] sm:$0xff]
      %v1416 = vld [vmem:[%s2 + $0x50] sm:$0xff]
      %v1417 = vld [vmem:[%s2 + $0x58] sm:$0xff]
      %v1418 = vld [vmem:[%s2 + $0x60] sm:$0xff]
      %v1419 = vld [vmem:[%s2 + $0x68] sm:$0xff]
      %v1420 = vld [vmem:[%s2 + $0x70] sm:$0xff]
      %v1421 = vld [vmem:[%s2 + $0x78] sm:$0xff]
      %v1422 = vld [vmem:[%s2 + $0x80] sm:$0xff]
      %v1423 = vld [vmem:[%s2 + $0x88] sm:$0xff]
      %v1424 = vld [vmem:[%s2 + $0x90] sm:$0xff]
      %v1425 = vld [vmem:[%s2 + $0x98] sm:$0xff]
      %v1426 = vld [vmem:[%s2 + $0xa0] sm:$0xff]
      %v1427 = vld [vmem:[%s2 + $0xa8] sm:$0xff]
      %v1428 = vld [vmem:[%s2 + $0xb0] sm:$0xff]
      %v1429 = vld [vmem:[%s2 + $0xb8] sm:$0xff]
      %v1430 = vld [vmem:[%s2 + $0xc0] sm:$0xff]
      %v1431 = vld [vmem:[%s2 + $0xc8] sm:$0xff]
      %v1432 = vld [vmem:[%s2 + $0xd0] sm:$0xff]
      %v1433 = vld [vmem:[%s2 + $0xd8] sm:$0xff]
      %v1434 = vld [vmem:[%s2 + $0xe0] sm:$0xff]
      %v1435 = vld [vmem:[%s2 + $0xe8] sm:$0xff]
      %v1436 = vld [vmem:[%s2 + $0xf0] sm:$0xff]
      %v1437 = vld [vmem:[%s2 + $0xf8] sm:$0xff]
      %v1438 = vld [vmem:[%s2 + $0x100] sm:$0xff]
      %v1439 = vld [vmem:[%s2 + $0x108] sm:$0xff]
      %v1440 = vld [vmem:[%s2 + $0x110] sm:$0xff]
      %v1441 = vld [vmem:[%s2 + $0x118] sm:$0xff]
      %v1442 = vld [vmem:[%s2 + $0x120] sm:$0xff]
      %v1443 = vld [vmem:[%s2 + $0x128] sm:$0xff]
      %v1444 = vld [vmem:[%s2 + $0x130] sm:$0xff]
      %v1445 = vld [vmem:[%s2 + $0x138] sm:$0xff]
      %v1446 = vld [vmem:[%s2 + $0x140] sm:$0xff]
      %v1447 = vld [vmem:[%s2 + $0x148] sm:$0xff]
      %v1448 = vld [vmem:[%s2 + $0x150] sm:$0xff]
      %v1449 = vld [vmem:[%s2 + $0x158] sm:$0xff]
      %v1450 = vld [vmem:[%s2 + $0x160] sm:$0xff]
      %v1451 = vld [vmem:[%s2 + $0x168] sm:$0xff]
      %v1452 = vld [vmem:[%s2 + $0x170] sm:$0xff]
      %v1453 = vld [vmem:[%s2 + $0x178] sm:$0xff]
      %v1454 = vld [vmem:[%s2 + $0x180] sm:$0xff]
      %v1455 = vld [vmem:[%s2 + $0x188] sm:$0xff]
      %v1456 = vld [vmem:[%s2 + $0x190] sm:$0xff]
      %v1457 = vld [vmem:[%s2 + $0x198] sm:$0xff]
      %v1458 = vld [vmem:[%s2 + $0x1a0] sm:$0xff]
      %v1459 = vld [vmem:[%s2 + $0x1a8] sm:$0xff]
      %v1460 = vld [vmem:[%s2 + $0x1b0] sm:$0xff]
      %v1461 = vld [vmem:[%s2 + $0x1b8] sm:$0xff]
      %v1462 = vld [vmem:[%s2 + $0x1c0] sm:$0xff]
      %v1463 = vld [vmem:[%s2 + $0x1c8] sm:$0xff]
      %v1464 = vld [vmem:[%s2 + $0x1d0] sm:$0xff]
      %v1465 = vld [vmem:[%s2 + $0x1d8] sm:$0xff]
      %v1466 = vld [vmem:[%s2 + $0x1e0] sm:$0xff]
      %v1467 = vld [vmem:[%s2 + $0x1e8] sm:$0xff]
      %v1468 = vld [vmem:[%s2 + $0x1f0] sm:$0xff]
      %v1469 = vld [vmem:[%s2 + $0x1f8] sm:$0xff]
      %v1470 = vld [vmem:[%s2 + $0x200] sm:$0xff]
      %v1471 = vld [vmem:[%s2 + $0x208] sm:$0xff]
      %v1472 = vld [vmem:[%s2 + $0x210] sm:$0xff]
      %v1473 = vld [vmem:[%s2 + $0x218] sm:$0xff]
      %v1474 = vld [vmem:[%s2 + $0x220] sm:$0xff]
      %v1475 = vld [vmem:[%s2 + $0x228] sm:$0xff]
      %v1476 = vld [vmem:[%s2 + $0x230] sm:$0xff]
      %v1477 = vld [vmem:[%s2 + $0x238] sm:$0xff]
      %v1478 = vld [vmem:[%s2 + $0x240] sm:$0xff]
      %v1479 = vld [vmem:[%s2 + $0x248] sm:$0xff]
      %v1480 = vld [vmem:[%s2 + $0x250] sm:$0xff]
      %v1481 = vld [vmem:[%s2 + $0x258] sm:$0xff]
      %v1482 = vld [vmem:[%s2 + $0x260] sm:$0xff]
      %v1483 = vld [vmem:[%s2 + $0x268] sm:$0xff]
      %v1484 = vld [vmem:[%s2 + $0x270] sm:$0xff]
      %v1485 = vld [vmem:[%s2 + $0x278] sm:$0xff]
      %v1486 = vld [vmem:[%s2 + $0x280] sm:$0xff]
      %v1487 = vld [vmem:[%s2 + $0x288] sm:$0xff]
      %v1488 = vld [vmem:[%s2 + $0x290] sm:$0xff]
      %v1489 = vld [vmem:[%s2 + $0x298] sm:$0xff]
      %v1490 = vld [vmem:[%s2 + $0x2a0] sm:$0xff]
      %v1491 = vld [vmem:[%s2 + $0x2a8] sm:$0xff]
      %v1492 = vld [vmem:[%s2 + $0x2b0] sm:$0xff]
      %v1493 = vld [vmem:[%s2 + $0x2b8] sm:$0xff]
      %v1494 = vld [vmem:[%s2 + $0x2c0] sm:$0xff]
      %v1495 = vld [vmem:[%s2 + $0x2c8] sm:$0xff]
      %v1496 = vld [vmem:[%s2 + $0x2d0] sm:$0xff]
      %v1497 = vld [vmem:[%s2 + $0x2d8] sm:$0xff]
      %v1498 = vld [vmem:[%s2 + $0x2e0] sm:$0xff]
      %v1499 = vld [vmem:[%s2 + $0x2e8] sm:$0xff]
      %v1500 = vld [vmem:[%s2 + $0x2f0] sm:$0xff]
      %v1501 = vld [vmem:[%s2 + $0x2f8] sm:$0xff]
      %v1502 = vld [vmem:[%s2 + $0x300] sm:$0xff]
      %v1503 = vld [vmem:[%s2 + $0x308] sm:$0xff]
      %v1504 = vld [vmem:[%s2 + $0x310] sm:$0xff]
      %v1505 = vld [vmem:[%s2 + $0x318] sm:$0xff]
      %v1506 = vld [vmem:[%s2 + $0x320] sm:$0xff]
      %v1507 = vld [vmem:[%s2 + $0x328] sm:$0xff]
      %v1508 = vld [vmem:[%s2 + $0x330] sm:$0xff]
      %v1509 = vld [vmem:[%s2 + $0x338] sm:$0xff]
      %v1510 = vld [vmem:[%s2 + $0x340] sm:$0xff]
      %v1511 = vld [vmem:[%s2 + $0x348] sm:$0xff]
      %v1512 = vld [vmem:[%s2 + $0x350] sm:$0xff]
      %v1513 = vld [vmem:[%s2 + $0x358] sm:$0xff]
      %v1514 = vld [vmem:[%s2 + $0x360] sm:$0xff]
      %v1515 = vld [vmem:[%s2 + $0x368] sm:$0xff]
      %v1516 = vld [vmem:[%s2 + $0x370] sm:$0xff]
      %v1517 = vld [vmem:[%s2 + $0x378] sm:$0xff]
      %v1518 = vld [vmem:[%s2 + $0x380] sm:$0xff]
      %v1519 = vld [vmem:[%s2 + $0x388] sm:$0xff]
      %v1520 = vld [vmem:[%s2 + $0x390] sm:$0xff]
      %v1521 = vld [vmem:[%s2 + $0x398] sm:$0xff]
      %v1522 = vld [vmem:[%s2 + $0x3a0] sm:$0xff]
      %v1523 = vld [vmem:[%s2 + $0x3a8] sm:$0xff]
      %v1524 = vld [vmem:[%s2 + $0x3b0] sm:$0xff]
      %v1525 = vld [vmem:[%s2 + $0x3b8] sm:$0xff]
      %v1526 = vld [vmem:[%s2 + $0x3c0] sm:$0xff]
      %v1527 = vld [vmem:[%s2 + $0x3c8] sm:$0xff]
      %v1528 = vld [vmem:[%s2 + $0x3d0] sm:$0xff]
      %v1529 = vld [vmem:[%s2 + $0x3d8] sm:$0xff]
      %v1530 = vld [vmem:[%s2 + $0x3e0] sm:$0xff]
      %v1531 = vld [vmem:[%s2 + $0x3e8] sm:$0xff]
      %v1532 = vld [vmem:[%s2 + $0x3f0] sm:$0xff]
      %v1533 = vld [vmem:[%s2 + $0x3f8] sm:$0xff]
      %1534 = vmatpush.msra.mxu0 %v1421
      %1535 = vmatpush.msra.mxu0 %v1420
      %1536 = vmatpush.msra.mxu0 %v1419
      %1537 = vmatpush.msra.mxu0 %v1418
      %1538 = vmatpush.msra.mxu0 %v1417
      %1539 = vmatpush.msra.mxu0 %v1416
      %1540 = vmatpush.msra.mxu0 %v1415
      %1541 = vmatpush.msra.mxu0 %v1414
      %1542 = vmatpush.msra.mxu0 %v1413
      %1543 = vmatpush.msra.mxu0 %v1412
      %1544 = vmatpush.msra.mxu0 %v1411
      %1545 = vmatpush.msra.mxu0 %v1410
      %1546 = vmatpush.msra.mxu0 %v1409
      %1547 = vmatpush.msra.mxu0 %v1408
      %1548 = vmatpush.msra.mxu0 %v1407
      %1549 = vmatpush.msra.mxu0 %v1406
      %1550 = vmatmul.f32.gmra.mxu0 %v774
      %v1551 = vpop.f32.mrf.mxu0
      %v1552 = vadd.f32 0.0, %v1551
      %1553 = vmatmul.f32.gmra.mxu0 %v775
      %v1554 = vpop.f32.mrf.mxu0
      %v1555 = vadd.f32 0.0, %v1554
      %1556 = vmatmul.f32.gmra.mxu0 %v776
      %v1557 = vpop.f32.mrf.mxu0
      %v1558 = vadd.f32 0.0, %v1557
      %1559 = vmatmul.f32.gmra.mxu0 %v777
      %v1560 = vpop.f32.mrf.mxu0
      %v1561 = vadd.f32 0.0, %v1560
      %1562 = vdwg.mxu0
      %1563 = vmatpush.msra.mxu0 %v1437
      %1564 = vmatpush.msra.mxu0 %v1436
      %1565 = vmatpush.msra.mxu0 %v1435
      %1566 = vmatpush.msra.mxu0 %v1434
      %1567 = vmatpush.msra.mxu0 %v1433
      %1568 = vmatpush.msra.mxu0 %v1432
      %1569 = vmatpush.msra.mxu0 %v1431
      %1570 = vmatpush.msra.mxu0 %v1430
      %1571 = vmatpush.msra.mxu0 %v1429
      %1572 = vmatpush.msra.mxu0 %v1428
      %1573 = vmatpush.msra.mxu0 %v1427
      %1574 = vmatpush.msra.mxu0 %v1426
      %1575 = vmatpush.msra.mxu0 %v1425
      %1576 = vmatpush.msra.mxu0 %v1424
      %1577 = vmatpush.msra.mxu0 %v1423
      %1578 = vmatpush.msra.mxu0 %v1422
      %1579 = vmatmul.f32.gmra.mxu0 %v858
      %v1580 = vpop.f32.mrf.mxu0
      %v1581 = vadd.f32 %v1552, %v1580
      %1582 = vmatmul.f32.gmra.mxu0 %v859
      %v1583 = vpop.f32.mrf.mxu0
      %v1584 = vadd.f32 %v1555, %v1583
      %1585 = vmatmul.f32.gmra.mxu0 %v860
      %v1586 = vpop.f32.mrf.mxu0
      %v1587 = vadd.f32 %v1558, %v1586
      %1588 = vmatmul.f32.gmra.mxu0 %v861
      %v1589 = vpop.f32.mrf.mxu0
      %v1590 = vadd.f32 %v1561, %v1589
      %1591 = vdwg.mxu0
      %1592 = vmatpush.msra.mxu0 %v1453
      %1593 = vmatpush.msra.mxu0 %v1452
      %1594 = vmatpush.msra.mxu0 %v1451
      %1595 = vmatpush.msra.mxu0 %v1450
      %1596 = vmatpush.msra.mxu0 %v1449
      %1597 = vmatpush.msra.mxu0 %v1448
      %1598 = vmatpush.msra.mxu0 %v1447
      %1599 = vmatpush.msra.mxu0 %v1446
      %1600 = vmatpush.msra.mxu0 %v1445
      %1601 = vmatpush.msra.mxu0 %v1444
      %1602 = vmatpush.msra.mxu0 %v1443
      %1603 = vmatpush.msra.mxu0 %v1442
      %1604 = vmatpush.msra.mxu0 %v1441
      %1605 = vmatpush.msra.mxu0 %v1440
      %1606 = vmatpush.msra.mxu0 %v1439
      %1607 = vmatpush.msra.mxu0 %v1438
      %1608 = vmatmul.f32.gmra.mxu0 %v942
      %v1609 = vpop.f32.mrf.mxu0
      %v1610 = vadd.f32 %v1581, %v1609
      %1611 = vmatmul.f32.gmra.mxu0 %v943
      %v1612 = vpop.f32.mrf.mxu0
      %v1613 = vadd.f32 %v1584, %v1612
      %1614 = vmatmul.f32.gmra.mxu0 %v944
      %v1615 = vpop.f32.mrf.mxu0
      %v1616 = vadd.f32 %v1587, %v1615
      %1617 = vmatmul.f32.gmra.mxu0 %v945
      %v1618 = vpop.f32.mrf.mxu0
      %v1619 = vadd.f32 %v1590, %v1618
      %1620 = vdwg.mxu0
      %1621 = vmatpush.msra.mxu0 %v1469
      %1622 = vmatpush.msra.mxu0 %v1468
      %1623 = vmatpush.msra.mxu0 %v1467
      %1624 = vmatpush.msra.mxu0 %v1466
      %1625 = vmatpush.msra.mxu0 %v1465
      %1626 = vmatpush.msra.mxu0 %v1464
      %1627 = vmatpush.msra.mxu0 %v1463
      %1628 = vmatpush.msra.mxu0 %v1462
      %1629 = vmatpush.msra.mxu0 %v1461
      %1630 = vmatpush.msra.mxu0 %v1460
      %1631 = vmatpush.msra.mxu0 %v1459
      %1632 = vmatpush.msra.mxu0 %v1458
      %1633 = vmatpush.msra.mxu0 %v1457
      %1634 = vmatpush.msra.mxu0 %v1456
      %1635 = vmatpush.msra.mxu0 %v1455
      %1636 = vmatpush.msra.mxu0 %v1454
      %1637 = vmatmul.f32.gmra.mxu0 %v1026
      %v1638 = vpop.f32.mrf.mxu0
      %v1639 = vadd.f32 %v1610, %v1638
      %1640 = vmatmul.f32.gmra.mxu0 %v1027
      %v1641 = vpop.f32.mrf.mxu0
      %v1642 = vadd.f32 %v1613, %v1641
      %1643 = vmatmul.f32.gmra.mxu0 %v1028
      %v1644 = vpop.f32.mrf.mxu0
      %v1645 = vadd.f32 %v1616, %v1644
      %1646 = vmatmul.f32.gmra.mxu0 %v1029
      %v1647 = vpop.f32.mrf.mxu0
      %v1648 = vadd.f32 %v1619, %v1647
      %1649 = vdwg.mxu0
      %1650 = vmatpush.msra.mxu0 %v1485
      %1651 = vmatpush.msra.mxu0 %v1484
      %1652 = vmatpush.msra.mxu0 %v1483
      %1653 = vmatpush.msra.mxu0 %v1482
      %1654 = vmatpush.msra.mxu0 %v1481
      %1655 = vmatpush.msra.mxu0 %v1480
      %1656 = vmatpush.msra.mxu0 %v1479
      %1657 = vmatpush.msra.mxu0 %v1478
      %1658 = vmatpush.msra.mxu0 %v1477
      %1659 = vmatpush.msra.mxu0 %v1476
      %1660 = vmatpush.msra.mxu0 %v1475
      %1661 = vmatpush.msra.mxu0 %v1474
      %1662 = vmatpush.msra.mxu0 %v1473
      %1663 = vmatpush.msra.mxu0 %v1472
      %1664 = vmatpush.msra.mxu0 %v1471
      %1665 = vmatpush.msra.mxu0 %v1470
      %1666 = vmatmul.f32.gmra.mxu0 %v1110
      %v1667 = vpop.f32.mrf.mxu0
      %v1668 = vadd.f32 %v1639, %v1667
      %1669 = vmatmul.f32.gmra.mxu0 %v1111
      %v1670 = vpop.f32.mrf.mxu0
      %v1671 = vadd.f32 %v1642, %v1670
      %1672 = vmatmul.f32.gmra.mxu0 %v1112
      %v1673 = vpop.f32.mrf.mxu0
      %v1674 = vadd.f32 %v1645, %v1673
      %1675 = vmatmul.f32.gmra.mxu0 %v1113
      %v1676 = vpop.f32.mrf.mxu0
      %v1677 = vadd.f32 %v1648, %v1676
      %1678 = vdwg.mxu0
      %1679 = vmatpush.msra.mxu0 %v1501
      %1680 = vmatpush.msra.mxu0 %v1500
      %1681 = vmatpush.msra.mxu0 %v1499
      %1682 = vmatpush.msra.mxu0 %v1498
      %1683 = vmatpush.msra.mxu0 %v1497
      %1684 = vmatpush.msra.mxu0 %v1496
      %1685 = vmatpush.msra.mxu0 %v1495
      %1686 = vmatpush.msra.mxu0 %v1494
      %1687 = vmatpush.msra.mxu0 %v1493
      %1688 = vmatpush.msra.mxu0 %v1492
      %1689 = vmatpush.msra.mxu0 %v1491
      %1690 = vmatpush.msra.mxu0 %v1490
      %1691 = vmatpush.msra.mxu0 %v1489
      %1692 = vmatpush.msra.mxu0 %v1488
      %1693 = vmatpush.msra.mxu0 %v1487
      %1694 = vmatpush.msra.mxu0 %v1486
      %1695 = vmatmul.f32.gmra.mxu0 %v1194
      %v1696 = vpop.f32.mrf.mxu0
      %v1697 = vadd.f32 %v1668, %v1696
      %1698 = vmatmul.f32.gmra.mxu0 %v1195
      %v1699 = vpop.f32.mrf.mxu0
      %v1700 = vadd.f32 %v1671, %v1699
      %1701 = vmatmul.f32.gmra.mxu0 %v1196
      %v1702 = vpop.f32.mrf.mxu0
      %v1703 = vadd.f32 %v1674, %v1702
      %1704 = vmatmul.f32.gmra.mxu0 %v1197
      %v1705 = vpop.f32.mrf.mxu0
      %v1706 = vadd.f32 %v1677, %v1705
      %1707 = vdwg.mxu0
      %1708 = vmatpush.msra.mxu0 %v1517
      %1709 = vmatpush.msra.mxu0 %v1516
      %1710 = vmatpush.msra.mxu0 %v1515
      %1711 = vmatpush.msra.mxu0 %v1514
      %1712 = vmatpush.msra.mxu0 %v1513
      %1713 = vmatpush.msra.mxu0 %v1512
      %1714 = vmatpush.msra.mxu0 %v1511
      %1715 = vmatpush.msra.mxu0 %v1510
      %1716 = vmatpush.msra.mxu0 %v1509
      %1717 = vmatpush.msra.mxu0 %v1508
      %1718 = vmatpush.msra.mxu0 %v1507
      %1719 = vmatpush.msra.mxu0 %v1506
      %1720 = vmatpush.msra.mxu0 %v1505
      %1721 = vmatpush.msra.mxu0 %v1504
      %1722 = vmatpush.msra.mxu0 %v1503
      %1723 = vmatpush.msra.mxu0 %v1502
      %1724 = vmatmul.f32.gmra.mxu0 %v1278
      %v1725 = vpop.f32.mrf.mxu0
      %v1726 = vadd.f32 %v1697, %v1725
      %1727 = vmatmul.f32.gmra.mxu0 %v1279
      %v1728 = vpop.f32.mrf.mxu0
      %v1729 = vadd.f32 %v1700, %v1728
      %1730 = vmatmul.f32.gmra.mxu0 %v1280
      %v1731 = vpop.f32.mrf.mxu0
      %v1732 = vadd.f32 %v1703, %v1731
      %1733 = vmatmul.f32.gmra.mxu0 %v1281
      %v1734 = vpop.f32.mrf.mxu0
      %v1735 = vadd.f32 %v1706, %v1734
      %1736 = vdwg.mxu0
      %1737 = vmatpush.msra.mxu0 %v1533
      %1738 = vmatpush.msra.mxu0 %v1532
      %1739 = vmatpush.msra.mxu0 %v1531
      %1740 = vmatpush.msra.mxu0 %v1530
      %1741 = vmatpush.msra.mxu0 %v1529
      %1742 = vmatpush.msra.mxu0 %v1528
      %1743 = vmatpush.msra.mxu0 %v1527
      %1744 = vmatpush.msra.mxu0 %v1526
      %1745 = vmatpush.msra.mxu0 %v1525
      %1746 = vmatpush.msra.mxu0 %v1524
      %1747 = vmatpush.msra.mxu0 %v1523
      %1748 = vmatpush.msra.mxu0 %v1522
      %1749 = vmatpush.msra.mxu0 %v1521
      %1750 = vmatpush.msra.mxu0 %v1520
      %1751 = vmatpush.msra.mxu0 %v1519
      %1752 = vmatpush.msra.mxu0 %v1518
      %1753 = vmatmul.f32.gmra.mxu0 %v1362
      %v1754 = vpop.f32.mrf.mxu0
      %v1755 = vadd.f32 %v1726, %v1754
      %1756 = vmatmul.f32.gmra.mxu0 %v1363
      %v1757 = vpop.f32.mrf.mxu0
      %v1758 = vadd.f32 %v1729, %v1757
      %1759 = vmatmul.f32.gmra.mxu0 %v1364
      %v1760 = vpop.f32.mrf.mxu0
      %v1761 = vadd.f32 %v1732, %v1760
      %1762 = vmatmul.f32.gmra.mxu0 %v1365
      %v1763 = vpop.f32.mrf.mxu0
      %v1764 = vadd.f32 %v1735, %v1763
      %1765 = vdwg.mxu0
      %v1766 = vsub.f32 %v1755, %v278
      %v1767 = vsub.f32 %v1758, %v279
      %v1768 = vsub.f32 %v1761, %v280
      %v1769 = vsub.f32 %v1764, %v281
      %v1770 = vadd.f32 %v278, %v1766
      %v1771 = vadd.f32 %v279, %v1767
      %v1772 = vadd.f32 %v280, %v1768
      %v1773 = vadd.f32 %v281, %v1769
      %1774 = vst [vmem:[%s267] sm:$0xff] %v1770
      %1775 = vst [vmem:[%s267 + $0x8] sm:$0xff] %v1771
      %1776 = vst [vmem:[%s267 + $0x10] sm:$0xff] %v1772
      %1777 = vst [vmem:[%s267 + $0x18] sm:$0xff] %v1773
      %v1778 = vmul.f32 %v1766, %v1766
      %v1779 = vmul.f32 %v1767, %v1767
      %v1780 = vmul.f32 %v1768, %v1768
      %v1781 = vmul.f32 %v1769, %v1769
      %v1782 = vadd.f32 %v1778, %v1779
      %v1783 = vadd.f32 %v1782, %v1780
      %v1784 = vadd.f32 %v1783, %v1781
      %1785 = vadd.xlane.f32.xlu0 %v1784
      %v1786 = vpop.xlane.xlu0 %1785
      %v1787 = vrot.slane %v1786, 4
      %v1788 = vadd.f32 %v1786, %v1787
      %v1789 = vrot.slane %v1788, 2
      %v1790 = vadd.f32 %v1788, %v1789
      %v1791 = vrot.slane %v1790, 1
      %v1792 = vadd.f32 %v1790, %v1791
      %s1793 = vtos %v1792
      %v1794 = vstv %s1793
      %1795 = vst [vmem:[%s277] sm:$0xff] %v1794
      %s1796 = smul.u32 4, %s18
      %p1797 = scmp.lt.s32.totalorder %s1796, 7
      %s1798 = scalar_select %p1797, %s1796, 7
      %s1799 = smul.addr %s1798, 8
      %s1800 = scalar_lea.vmem %s4, %s1799
      %p1801 = scmp.lt.s32.totalorder %s18, 1
      %s1802 = scalar_select %p1801, %s18, 1
      %s1803 = smul.addr %s1802, 4
      %s1804 = smul.addr %s1803, 8
      %s1805 = scalar_lea.vmem %s5, %s1804
      %p1806 = scmp.lt.s32.totalorder %s18, 1
      %s1807 = scalar_select %p1806, %s18, 1
      %s1808 = smul.addr %s1807, 8
      %s1809 = scalar_lea.vmem %s6, %s1808
      // Predicated region
      $region37: #{codebook_forward.1} parent=35 // pred_check
        %p1810 = pneg %p125
      $region38: #{codebook_forward.1} parent=35 // pred_check_branch
        %1812 = sbr.rel (%p1810) target = $region40
      $region39: #{codebook_forward.1} parent=35 // pred_region
        %s1813 = smul.u32 4, %s18
      $region40: #{codebook_forward.1} parent=35 // pred_fallthru
        _
      // Predicated region
      $region41: #{codebook_forward.1} parent=35 // pred_check
        %p1814 = pneg %p151
      $region42: #{codebook_forward.1} parent=35 // pred_check_branch
        %1816 = sbr.rel (%p1814) target = $region44
      $region43: #{codebook_forward.1} parent=35 // pred_region
        _
      $region44: #{codebook_forward.1} parent=35 // pred_fallthru
        _
      // Predicated region
      $region45: #{codebook_forward.1} parent=35 // pred_check
        %p1817 = pneg %p177
      $region46: #{codebook_forward.1} parent=35 // pred_check_branch
        %1819 = sbr.rel (%p1817) target = $region48
      $region47: #{codebook_forward.1} parent=35 // pred_region
        _
      $region48: #{codebook_forward.1} parent=35 // pred_fallthru
        _
    $region36: #{codebook_forward.1} parent=5 // pred_fallthru
      _
    %p1820 = scmp.le.s32.totalorder 2, %s13
    // Predicated region
    $region49: #{codebook_forward.1} parent=5 // pred_check
      %p1821 = pneg %p1820
    $region50: #{codebook_forward.1} parent=5 // pred_check_branch
      %1823 = sbr.rel (%p1821) target = $region52
    $region51: #{codebook_forward.1} parent=5 // pred_region
      %s1824 = ssub.s32 %s13, 2
      // Predicated region
      $region53: #{codebook_forward.1} parent=51 // pred_check
        %p1825 = pneg %p131
      $region54: #{codebook_forward.1} parent=51 // pred_check_branch
        %1827 = sbr.rel (%p1825) target = $region56
      $region55: #{codebook_forward.1} parent=51 // pred_region
        %s1828 = smul.u32 4, %s19
        %p1829 = scmp.lt.s32.totalorder %s1828, 7
        %s1830 = scalar_select %p1829, %s1828, 7
        %s1831 = smul.addr %s1830, 8
        %s1832 = scalar_lea.vmem %s4, %s1831
      $region56: #{codebook_forward.1} parent=51 // pred_fallthru
        _
      // Predicated region
      $region57: #{codebook_forward.1} parent=51 // pred_check
        %p1833 = pneg %p157
      $region58: #{codebook_forward.1} parent=51 // pred_check_branch
        %1835 = sbr.rel (%p1833) target = $region60
      $region59: #{codebook_forward.1} parent=51 // pred_region
        %p1836 = scmp.lt.s32.totalorder %s19, 1
        %s1837 = scalar_select %p1836, %s19, 1
        %s1838 = smul.addr %s1837, 4
        %s1839 = smul.addr %s1838, 8
        %s1840 = scalar_lea.vmem %s5, %s1839
      $region60: #{codebook_forward.1} parent=51 // pred_fallthru
        _
      // Predicated region
      $region61: #{codebook_forward.1} parent=51 // pred_check
        %p1841 = pneg %p183
      $region62: #{codebook_forward.1} parent=51 // pred_check_branch
        %1843 = sbr.rel (%p1841) target = $region64
      $region63: #{codebook_forward.1} parent=51 // pred_region
        %p1844 = scmp.lt.s32.totalorder %s19, 1
        %s1845 = scalar_select %p1844, %s19, 1
        %s1846 = smul.addr %s1845, 8
        %s1847 = scalar_lea.vmem %s6, %s1846
      $region64: #{codebook_forward.1} parent=51 // pred_fallthru
        _
    $region52: #{codebook_forward.1} parent=5 // pred_fallthru
      _
  $region6: #{codebook_forward.1} parent=0 // loop_footer
    %s17 = sadd.s32 1, %s13
  $region7: #{codebook_forward.1} parent=0 // loop_footer_branch
    %12 = sbr.rel target = $region3
  $region8: #{codebook_forward.1} parent=0 // loop_exit
    _

</llo_original>
